<compile_context>
chip_gen: v6e
topology: v6e:2x2x1
jax: 0.10.0
libtpu: 0.0.40
codegen_flags: <defaults>
</compile_context>

<pallas_src>
import jax
import jax.numpy as jnp
from jax import lax
from jax.experimental import pallas as pl
from jax.experimental.pallas import tpu as pltpu


def _round_up(x, m):
    return ((x + m - 1) // m) * m


def _genvar_kernel(ctx_ref, qb_ref, lens_ref, w1_ref, w_ref, out_ref):
    """One grid step: a block of `bb` batch rows.

    ctx_ref : (bb*Tp, Dc)        context rows, flattened over (batch, time)
    qb_ref  : (bb, H)            precomputed  query @ W2 + b   (f32)
    lens_ref: (bb, 1)            int32 valid lengths
    w1_ref  : (Dc, H)
    w_ref   : (1, H)
    out_ref : (bb//pack, pack*Dc) lane-packed attention output (f32)
    """
    bb, h = qb_ref.shape
    dc = w1_ref.shape[0]
    tp = ctx_ref.shape[0] // bb
    pack = out_ref.shape[1] // dc
    gsz = bb // pack

    ctx = ctx_ref[...]                                               # (bb*Tp, Dc)

    # Context projection on the MXU: (bb*Tp, Dc) @ (Dc, H) -> f32 accumulate.
    proj = jnp.dot(ctx, w1_ref[...], preferred_element_type=jnp.float32)

    # Lane-aligned (last dim = H) split of the leading dim; Tp % 8 == 0 so this
    # is a free view, not a relayout copy.
    u = jnp.tanh(proj.reshape(bb, tp, h) + qb_ref[...][:, None, :])  # (bb, Tp, H) f32

    # scores = u @ w  (lw Linear with weight (1, H)) as a lane reduction (XLU).
    scores = jnp.sum(u * w_ref[...], axis=-1)                        # (bb, Tp)

    # Mask t >= lens[b] with -inf (this also masks the Tp padding).
    pos = lax.broadcasted_iota(jnp.int32, (bb, tp), 1)
    scores = jnp.where(pos < lens_ref[...], scores, -jnp.inf)

    # weights = exp(scores) / sum exp(scores)   (faithful: no max-subtraction;
    # exp(-inf) == 0, so masked positions drop out of the sum).
    e = jnp.exp(scores)
    weights = e / jnp.sum(e, axis=-1, keepdims=True)                 # (bb, Tp) f32

    # Weighted context sum, written lane-dense: `pack` consecutive batch
    # sub-groups share one 128-lane output row.
    ctx3 = ctx.astype(jnp.float32).reshape(bb, tp, dc)               # free view (Tp % 8 == 0)
    for g in range(pack):
        w_g = weights[g * gsz:(g + 1) * gsz]                         # (gsz, Tp)
        c_g = ctx3[g * gsz:(g + 1) * gsz]                            # (gsz, Tp, Dc)
        out_ref[:, g * dc:(g + 1) * dc] = jnp.sum(w_g[:, :, None] * c_g, axis=1)


def _choose_block_b(batch, tp, dc, h, in_bytes, unit):
    """Pick a batch-block size by on-chip footprint, not by MXU-row count."""
    # Bytes per batch row resident per step: double-buffered ctx + qb + out
    # blocks plus the f32 proj/u intermediates (the dominant term).
    per_row = (2 * tp * dc * in_bytes      # ctx block (x2 buffers)
               + 2 * tp * h * 4            # proj + u f32 intermediates
               + 2 * h * 4                 # qb block (x2 buffers)
               + 2 * dc * 4)               # out block (x2 buffers)
    budget = 24 * 1024 * 1024              # fits v7x (64 MiB VMEM) w/ headroom
    bb = max(unit, (budget // per_row) // unit * unit)
    b_pad_min = _round_up(batch, unit)
    bb = min(bb, b_pad_min)
    # Guarantee >= 2 grid steps when the batch allows it, so the "parallel"
    # axis can shard across v7x's two TensorCores.
    if bb >= b_pad_min and b_pad_min >= 2 * unit:
        bb = _round_up((b_pad_min + 1) // 2, unit)
    return bb


def gen_var_pallas(encoder_state, context, context_lens, params,
                   *, input_dtype=jnp.float32, block_b=None):
    """Pallas forward of GenVar.

    encoder_state: (1, B, Dq) float32
    context:       (B, T, Dc) float32
    context_lens:  (B,) int32
    input_dtype:   storage/MXU dtype for context & W1 (f32 or bf16);
                   all elementwise math stays f32.
    returns:       (B, Dc) float32
    """
    query = jnp.squeeze(encoder_state, axis=0)                       # (B, Dq)
    B, T, Dc = context.shape
    H = params["W1"].shape[1]

    # Hoisted query projection: one batched XLA matmul (overlappable with the
    # pallas_call thanks to the cost estimate).
    qb = (query @ params["W2"] + params["b"]).astype(jnp.float32)    # (B, H)

    # Lane-pack factor for the output: pack 128/Dc batch rows per 128-lane row
    # when Dc < 128 (lane-dense stores / HBM writeback).
    pack = 128 // Dc if (Dc < 128 and 128 % Dc == 0) else 1
    unit = 8 * pack                                                  # bb granularity

    Tp = _round_up(T, 8)                                             # free kernel views need Tp % 8 == 0
    in_bytes = jnp.dtype(input_dtype).itemsize

    if block_b is None:
        bb = _choose_block_b(B, Tp, Dc, H, in_bytes, unit)
    else:
        bb = _round_up(max(block_b, unit), unit)
    Bp = _round_up(B, bb)

    # Padding: padded batch rows get lens=Tp and zero context/qb, so their
    # softmax is finite and their output is exactly zero (discarded below).
    pad_b, pad_t = Bp - B, Tp - T
    ctx_p = jnp.pad(context, ((0, pad_b), (0, pad_t), (0, 0))).astype(input_dtype)
    ctx_flat = ctx_p.reshape(Bp * Tp, Dc)                            # metadata-only in XLA
    qb_p = jnp.pad(qb, ((0, pad_b), (0, 0)))
    lens_p = jnp.pad(context_lens.astype(jnp.int32), ((0, pad_b),),
                     constant_values=Tp).reshape(Bp, 1)
    w1 = params["W1"].astype(input_dtype)
    w = params["w"].astype(jnp.float32)

    cost = pl.CostEstimate(
        flops=2 * Bp * Tp * Dc * H + 4 * Bp * Tp * (H + Dc),
        transcendentals=Bp * Tp * (H + 1),
        bytes_accessed=(Bp * Tp * Dc * in_bytes + Bp * (H + Dc + 1) * 4
                        + Dc * H * in_bytes + H * 4),
    )

    out_packed = pl.pallas_call(
        _genvar_kernel,
        out_shape=jax.ShapeDtypeStruct((Bp // pack, pack * Dc), jnp.float32),
        grid_spec=pltpu.PrefetchScalarGridSpec(
            num_scalar_prefetch=0,
            grid=(Bp // bb,),
            in_specs=[
                pl.BlockSpec((bb * Tp, Dc), lambda i: (i, 0)),       # context (flat)
                pl.BlockSpec((bb, H),       lambda i: (i, 0)),       # query@W2 + b
                pl.BlockSpec((bb, 1),       lambda i: (i, 0)),       # lens
                pl.BlockSpec((Dc, H),       lambda i: (0, 0)),       # W1
                pl.BlockSpec((1, H),        lambda i: (0, 0)),       # w (lw)
            ],
            out_specs=pl.BlockSpec((bb // pack, pack * Dc), lambda i: (i, 0)),
        ),
        compiler_params=pltpu.CompilerParams(
            dimension_semantics=("parallel",),
            vmem_limit_bytes=48 * 1024 * 1024),
        cost_estimate=cost,
    )(ctx_flat, qb_p, lens_p, w1, w)

    # Un-pack the lane-packed output back to (Bp, Dc) — a tiny (B, Dc) shuffle.
    out = jnp.transpose(out_packed.reshape(Bp // bb, bb // pack, pack, Dc),
                        (0, 2, 1, 3)).reshape(Bp, Dc)
    return out[:B]


def gen_var_reference(encoder_state, context, context_lens, params):
    """Plain-JAX reference matching the torch code."""
    query = jnp.squeeze(encoder_state, axis=0)                       # (B, Dq)
    u = jnp.tanh(context @ params["W1"]
                 + (query @ params["W2"])[:, None, :]
                 + params["b"][None, :, :])                          # (B, T, H)
    scores = jnp.sum(u * params["w"][None, :, :], axis=-1)           # (B, T)
    T = context.shape[1]
    mask = jnp.arange(T)[None, :] < context_lens[:, None]
    scores = jnp.where(mask, scores, -jnp.inf)
    e = jnp.exp(scores)
    w = e / jnp.sum(e, axis=-1, keepdims=True)
    return jnp.sum(w[..., None] * context, axis=1)                   # (B, Dc)


if __name__ == "__main__":
    # Small shapes consistent with the module.
    B = 4           # batch
    T = 8           # text_len
    Dc = 32         # dim_context
    Dq = 32         # dim_encoder_state
    H = 128         # dim_attn_hidden

    key = jax.random.PRNGKey(0)
    k_ctx, k_q, k_w1, k_w2, k_b, k_w = jax.random.split(key, 6)

    context = jax.random.normal(k_ctx, (B, T, Dc), dtype=jnp.float32)
    encoder_state = jax.random.normal(k_q, (1, B, Dq), dtype=jnp.float32)
    context_lens = jnp.array([T, T - 3, T - 1, T - 5], dtype=jnp.int32)

    # Deterministic synthetic parameters (shapes follow RelevantScore.__init__).
    params = {
        "W1": 0.1 * jax.random.normal(k_w1, (Dc, H), dtype=jnp.float32),  # lW1
        "W2": 0.1 * jax.random.normal(k_w2, (Dq, H), dtype=jnp.float32),  # lW2
        "b": 0.01 * jax.random.normal(k_b, (1, H), dtype=jnp.float32),    # bias
        "w": 0.1 * jax.random.normal(k_w, (1, H), dtype=jnp.float32),     # lw
    }

    # TODO(synk): softmax has no max-subtraction and lens==0 gives 0/0 NaN,
    # both faithful to the torch reference (not guarded here).
    ref = gen_var_reference(encoder_state, context, context_lens, params)

    # f32 storage path (bit-faithful dtype plan; also the v5e default).
    out_f32 = gen_var_pallas(encoder_state, context, context_lens, params,
                             input_dtype=jnp.float32)
    out_f32 = jax.block_until_ready(out_f32)
    assert out_f32.shape == (B, Dc)
    assert jnp.allclose(out_f32, ref, rtol=1e-5, atol=1e-5), (out_f32, ref)

    # bf16 context/W1 storage + MXU path (halves the dominant HBM stream on
    # v6e/v7x); elementwise math stays f32, so only the cast costs precision.
    out_bf16 = gen_var_pallas(encoder_state, context, context_lens, params,
                              input_dtype=jnp.bfloat16)
    out_bf16 = jax.block_until_ready(out_bf16)
    assert out_bf16.shape == (B, Dc)
    assert jnp.allclose(out_bf16, ref, rtol=3e-2, atol=3e-2), (out_bf16, ref)

    print("KERNEL_OK")
</pallas_src>

<mosaic_0001>
module attributes {stable_mosaic.version = 11 : i64} {
  func.func @_genvar_kernel(%arg0: i32, %arg1: memref<256x32xf32, #tpu.memory_space<vmem>>, %arg2: memref<32x128xf32, #tpu.memory_space<vmem>>, %arg3: memref<32x1xi32, #tpu.memory_space<vmem>>, %arg4: memref<32x128xf32, #tpu.memory_space<vmem>>, %arg5: memref<1x128xf32, #tpu.memory_space<vmem>>, %arg6: memref<8x128xf32, #tpu.memory_space<vmem>>) attributes {dimension_semantics = [#tpu.dimension_semantics<parallel>], iteration_bounds = array<i64: 1>, scalar_prefetch = 0 : i64, scratch_operands = 0 : i64, tpu.core_type = #tpu.core_type<tc>, window_params = [{transform_indices = @transform_0, window_bounds = array<i64: 256, 32>}, {transform_indices = @transform_1, window_bounds = array<i64: 32, 128>}, {transform_indices = @transform_2, window_bounds = array<i64: 32, 1>}, {pipeline_mode = #tpu.pipeline_mode<synchronous>, transform_indices = @transform_3, window_bounds = array<i64: 32, 128>}, {pipeline_mode = #tpu.pipeline_mode<synchronous>, transform_indices = @transform_4, window_bounds = array<i64: 1, 128>}, {transform_indices = @transform_5, window_bounds = array<i64: 8, 128>}]} {
    %c0 = arith.constant 0 : index
    %c0_0 = arith.constant 0 : index
    %0 = vector.load %arg1[%c0, %c0_0] : memref<256x32xf32, #tpu.memory_space<vmem>>, vector<256x32xf32>
    %c0_1 = arith.constant 0 : index
    %c0_2 = arith.constant 0 : index
    %1 = vector.load %arg4[%c0_1, %c0_2] : memref<32x128xf32, #tpu.memory_space<vmem>>, vector<32x128xf32>
    %cst = arith.constant dense<0.000000e+00> : vector<256x128xf32>
    %2 = tpu.matmul %0, %1, %cst {dimension_numbers = #tpu.dot_dimension_numbers<[1], [0], [0], [1], [0, 0, 1, 1], [], []>} : vector<256x32xf32>, vector<32x128xf32>, vector<256x128xf32> -> vector<256x128xf32>
    %3 = vector.shape_cast %2 : vector<256x128xf32> to vector<32x8x128xf32>
    %c0_3 = arith.constant 0 : index
    %c0_4 = arith.constant 0 : index
    %4 = vector.load %arg2[%c0_3, %c0_4] : memref<32x128xf32, #tpu.memory_space<vmem>>, vector<32x128xf32>
    %5 = vector.shape_cast %4 : vector<32x128xf32> to vector<32x1x128xf32>
    %6 = vector.broadcast %5 : vector<32x1x128xf32> to vector<32x8x128xf32>
    %7 = arith.addf %3, %6 : vector<32x8x128xf32>
    %8 = math.tanh %7 : vector<32x8x128xf32>
    %c0_5 = arith.constant 0 : index
    %c0_6 = arith.constant 0 : index
    %9 = vector.load %arg5[%c0_5, %c0_6] : memref<1x128xf32, #tpu.memory_space<vmem>>, vector<1x128xf32>
    %10 = vector.shape_cast %9 : vector<1x128xf32> to vector<1x1x128xf32>
    %11 = vector.broadcast %10 : vector<1x1x128xf32> to vector<32x8x128xf32>
    %12 = arith.mulf %8, %11 : vector<32x8x128xf32>
    %cst_7 = arith.constant dense<0.000000e+00> : vector<32x8xf32>
    %13 = vector.multi_reduction <add>, %12, %cst_7 [2] : vector<32x8x128xf32> to vector<32x8xf32>
    %14 = tpu.iota {dimensions = array<i32: 1>} : vector<32x8xi32>
    %c0_8 = arith.constant 0 : index
    %c0_9 = arith.constant 0 : index
    %15 = vector.load %arg3[%c0_8, %c0_9] : memref<32x1xi32, #tpu.memory_space<vmem>>, vector<32x1xi32>
    %16 = vector.broadcast %15 : vector<32x1xi32> to vector<32x8xi32>
    %17 = arith.cmpi slt, %14, %16 : vector<32x8xi32>
    %cst_10 = arith.constant 0xFF800000 : f32
    %18 = vector.broadcast %cst_10 : f32 to vector<32x8xf32>
    %19 = arith.select %17, %13, %18 : vector<32x8xi1>, vector<32x8xf32>
    %20 = math.exp %19 : vector<32x8xf32>
    %cst_11 = arith.constant dense<0.000000e+00> : vector<32xf32>
    %21 = vector.multi_reduction <add>, %20, %cst_11 [1] : vector<32x8xf32> to vector<32xf32>
    %22 = vector.shape_cast %21 : vector<32xf32> to vector<32x1xf32>
    %23 = vector.broadcast %22 : vector<32x1xf32> to vector<32x8xf32>
    %24 = arith.divf %20, %23 : vector<32x8xf32>
    %25 = vector.shape_cast %0 : vector<256x32xf32> to vector<32x8x32xf32>
    %26 = vector.extract_strided_slice %24 {offsets = [0, 0], sizes = [8, 8], strides = [1, 1]} : vector<32x8xf32> to vector<8x8xf32>
    %27 = vector.extract_strided_slice %25 {offsets = [0, 0, 0], sizes = [8, 8, 32], strides = [1, 1, 1]} : vector<32x8x32xf32> to vector<8x8x32xf32>
    %28 = vector.shape_cast %26 : vector<8x8xf32> to vector<8x8x1xf32>
    %29 = vector.broadcast %28 : vector<8x8x1xf32> to vector<8x8x32xf32>
    %30 = arith.mulf %29, %27 : vector<8x8x32xf32>
    %cst_12 = arith.constant dense<0.000000e+00> : vector<8x32xf32>
    %31 = vector.multi_reduction <add>, %30, %cst_12 [1] : vector<8x8x32xf32> to vector<8x32xf32>
    %c0_13 = arith.constant 0 : index
    %c0_14 = arith.constant 0 : index
    %32 = vector.load %arg6[%c0_13, %c0_14] : memref<8x128xf32, #tpu.memory_space<vmem>>, vector<8x32xf32>
    tpu.vector_store %arg6[%c0_13, %c0_14], %31 {strides = array<i32>} : memref<8x128xf32, #tpu.memory_space<vmem>>, vector<8x32xf32>,
    %33 = vector.extract_strided_slice %24 {offsets = [8, 0], sizes = [8, 8], strides = [1, 1]} : vector<32x8xf32> to vector<8x8xf32>
    %34 = vector.extract_strided_slice %25 {offsets = [8, 0, 0], sizes = [8, 8, 32], strides = [1, 1, 1]} : vector<32x8x32xf32> to vector<8x8x32xf32>
    %35 = vector.shape_cast %33 : vector<8x8xf32> to vector<8x8x1xf32>
    %36 = vector.broadcast %35 : vector<8x8x1xf32> to vector<8x8x32xf32>
    %37 = arith.mulf %36, %34 : vector<8x8x32xf32>
    %cst_15 = arith.constant dense<0.000000e+00> : vector<8x32xf32>
    %38 = vector.multi_reduction <add>, %37, %cst_15 [1] : vector<8x8x32xf32> to vector<8x32xf32>
    %c0_16 = arith.constant 0 : index
    %c32 = arith.constant 32 : index
    %39 = vector.load %arg6[%c0_16, %c32] : memref<8x128xf32, #tpu.memory_space<vmem>>, vector<8x32xf32>
    tpu.vector_store %arg6[%c0_16, %c32], %38 {strides = array<i32>} : memref<8x128xf32, #tpu.memory_space<vmem>>, vector<8x32xf32>,
    %40 = vector.extract_strided_slice %24 {offsets = [16, 0], sizes = [8, 8], strides = [1, 1]} : vector<32x8xf32> to vector<8x8xf32>
    %41 = vector.extract_strided_slice %25 {offsets = [16, 0, 0], sizes = [8, 8, 32], strides = [1, 1, 1]} : vector<32x8x32xf32> to vector<8x8x32xf32>
    %42 = vector.shape_cast %40 : vector<8x8xf32> to vector<8x8x1xf32>
    %43 = vector.broadcast %42 : vector<8x8x1xf32> to vector<8x8x32xf32>
    %44 = arith.mulf %43, %41 : vector<8x8x32xf32>
    %cst_17 = arith.constant dense<0.000000e+00> : vector<8x32xf32>
    %45 = vector.multi_reduction <add>, %44, %cst_17 [1] : vector<8x8x32xf32> to vector<8x32xf32>
    %c0_18 = arith.constant 0 : index
    %c64 = arith.constant 64 : index
    %46 = vector.load %arg6[%c0_18, %c64] : memref<8x128xf32, #tpu.memory_space<vmem>>, vector<8x32xf32>
    tpu.vector_store %arg6[%c0_18, %c64], %45 {strides = array<i32>} : memref<8x128xf32, #tpu.memory_space<vmem>>, vector<8x32xf32>,
    %47 = vector.extract_strided_slice %24 {offsets = [24, 0], sizes = [8, 8], strides = [1, 1]} : vector<32x8xf32> to vector<8x8xf32>
    %48 = vector.extract_strided_slice %25 {offsets = [24, 0, 0], sizes = [8, 8, 32], strides = [1, 1, 1]} : vector<32x8x32xf32> to vector<8x8x32xf32>
    %49 = vector.shape_cast %47 : vector<8x8xf32> to vector<8x8x1xf32>
    %50 = vector.broadcast %49 : vector<8x8x1xf32> to vector<8x8x32xf32>
    %51 = arith.mulf %50, %48 : vector<8x8x32xf32>
    %cst_19 = arith.constant dense<0.000000e+00> : vector<8x32xf32>
    %52 = vector.multi_reduction <add>, %51, %cst_19 [1] : vector<8x8x32xf32> to vector<8x32xf32>
    %c0_20 = arith.constant 0 : index
    %c96 = arith.constant 96 : index
    %53 = vector.load %arg6[%c0_20, %c96] : memref<8x128xf32, #tpu.memory_space<vmem>>, vector<8x32xf32>
    tpu.vector_store %arg6[%c0_20, %c96], %52 {strides = array<i32>} : memref<8x128xf32, #tpu.memory_space<vmem>>, vector<8x32xf32>,
    return
  }
  func.func @transform_0(%arg0: i32) -> (i32, i32) {
    %c0_i32 = arith.constant 0 : i32
    %c0_i32_0 = arith.constant 0 : i32
    return %arg0, %c0_i32 : i32, i32
  }
  func.func @transform_1(%arg0: i32) -> (i32, i32) {
    %c0_i32 = arith.constant 0 : i32
    %c0_i32_0 = arith.constant 0 : i32
    return %arg0, %c0_i32 : i32, i32
  }
  func.func @transform_2(%arg0: i32) -> (i32, i32) {
    %c0_i32 = arith.constant 0 : i32
    %c0_i32_0 = arith.constant 0 : i32
    return %arg0, %c0_i32 : i32, i32
  }
  func.func @transform_3(%arg0: i32) -> (i32, i32) {
    %c0_i32 = arith.constant 0 : i32
    %c0_i32_0 = arith.constant 0 : i32
    %c0_i32_1 = arith.constant 0 : i32
    return %c0_i32, %c0_i32_0 : i32, i32
  }
  func.func @transform_4(%arg0: i32) -> (i32, i32) {
    %c0_i32 = arith.constant 0 : i32
    %c0_i32_0 = arith.constant 0 : i32
    %c0_i32_1 = arith.constant 0 : i32
    return %c0_i32, %c0_i32_0 : i32, i32
  }
  func.func @transform_5(%arg0: i32) -> (i32, i32) {
    %c0_i32 = arith.constant 0 : i32
    %c0_i32_0 = arith.constant 0 : i32
    return %arg0, %c0_i32 : i32, i32
  }
}

</mosaic_0001>

<llo_original>
// kernel: tpu_custom_call.1
$region0: #{tpu_custom_call.1}
  #allocation0 [shape = 'u32[]', space=smem, size = 0x4, offset = 0x4, fixed_abs, tag = 'smem constant byte address 0x4 - core index']
  #allocation1 [shape = 'u32[144,128]{1,0:T(1,128)}', space=vmem, size = 0x12000, scoped, tag = 'internal scratch']
  %s0 = inlined_call_operand.vmem [shape: f32[256,32], index: 0, kind: input, shape index: {}]
  %s1 = inlined_call_operand.vmem [shape: f32[32,128], index: 1, kind: input, shape index: {}]
  %s2 = inlined_call_operand.vmem [shape: s32[32,1], index: 2, kind: input, shape index: {}]
  %s3 = inlined_call_operand.vmem [shape: f32[32,128], index: 3, kind: input, shape index: {}]
  %s4 = inlined_call_operand.vmem [shape: f32[1,128], index: 4, kind: input, shape index: {}]
  %s5 = inlined_call_operand.hbm [shape: f32[8,128], index: 5, kind: output, shape index: {}]
  %s6 = sld [smem:[#allocation0]]
  $region30: #{tpu_custom_call.1} parent=0
    _
  %s8 = ssub.s32 1, %s6
  %s9 = scalar_select 0, %s8, %s6
  $region1: #{tpu_custom_call.1} parent=0
    #allocation2 [shape = 'u8[4096]{0}', space=vmem, size = 0x1000, scoped, tag = 'output window, operand 0, single buffered']
    #allocation3 [shape = 's32[1]{0}', space=sflag, size = 0x4, scoped, tag = 'scoped memory for tpu_custom_call.1']
    %10 = vsyncpa [#allocation3], 0
    // Predicated region
    $region2: #{tpu_custom_call.1} parent=1 // pred_check
      _
    $region3: #{tpu_custom_call.1} parent=1 // pred_check_branch
      %12 = sbr.rel (0) target = $region5
    $region4: #{tpu_custom_call.1} parent=1 // pred_region
      _
    $region5: #{tpu_custom_call.1} parent=1 // pred_fallthru
      _
    // Predicated region
    $region6: #{tpu_custom_call.1} parent=1 // pred_check
      _
    $region7: #{tpu_custom_call.1} parent=1 // pred_check_branch
      %14 = sbr.rel (0) target = $region9
    $region8: #{tpu_custom_call.1} parent=1 // pred_region
      _
    $region9: #{tpu_custom_call.1} parent=1 // pred_fallthru
      _
    // Predicated region
    $region10: #{tpu_custom_call.1} parent=1 // pred_check
      _
    $region11: #{tpu_custom_call.1} parent=1 // pred_check_branch
      %16 = sbr.rel (0) target = $region13
    $region12: #{tpu_custom_call.1} parent=1 // pred_region
      _
    $region13: #{tpu_custom_call.1} parent=1 // pred_fallthru
      _
    // Predicated region
    $region14: #{tpu_custom_call.1} parent=1 // pred_check
      _
    $region15: #{tpu_custom_call.1} parent=1 // pred_check_branch
      %18 = sbr.rel (0) target = $region17
    $region16: #{tpu_custom_call.1} parent=1 // pred_region
      _
    $region17: #{tpu_custom_call.1} parent=1 // pred_fallthru
      _
    // Predicated region
    $region18: #{tpu_custom_call.1} parent=1 // pred_check
      _
    $region19: #{tpu_custom_call.1} parent=1 // pred_check_branch
      %20 = sbr.rel (0) target = $region21
    $region20: #{tpu_custom_call.1} parent=1 // pred_region
      _
    $region21: #{tpu_custom_call.1} parent=1 // pred_fallthru
      _
    %v21 = vld [vmem:[%s0] sm:$0xff]
    %v22 = vld [vmem:[%s0 + $0x8] sm:$0xff]
    %v23 = vld [vmem:[%s0 + $0x10] sm:$0xff]
    %v24 = vld [vmem:[%s0 + $0x18] sm:$0xff]
    %v25 = vld [vmem:[%s0 + $0x20] sm:$0xff]
    %v26 = vld [vmem:[%s0 + $0x28] sm:$0xff]
    %v27 = vld [vmem:[%s0 + $0x30] sm:$0xff]
    %v28 = vld [vmem:[%s0 + $0x38] sm:$0xff]
    %v29 = vld [vmem:[%s0 + $0x40] sm:$0xff]
    %v30 = vld [vmem:[%s0 + $0x48] sm:$0xff]
    %v31 = vld [vmem:[%s0 + $0x50] sm:$0xff]
    %v32 = vld [vmem:[%s0 + $0x58] sm:$0xff]
    %v33 = vld [vmem:[%s0 + $0x60] sm:$0xff]
    %v34 = vld [vmem:[%s0 + $0x68] sm:$0xff]
    %v35 = vld [vmem:[%s0 + $0x70] sm:$0xff]
    %v36 = vld [vmem:[%s0 + $0x78] sm:$0xff]
    %v37 = vld [vmem:[%s0 + $0x80] sm:$0xff]
    %v38 = vld [vmem:[%s0 + $0x88] sm:$0xff]
    %v39 = vld [vmem:[%s0 + $0x90] sm:$0xff]
    %v40 = vld [vmem:[%s0 + $0x98] sm:$0xff]
    %v41 = vld [vmem:[%s0 + $0xa0] sm:$0xff]
    %v42 = vld [vmem:[%s0 + $0xa8] sm:$0xff]
    %v43 = vld [vmem:[%s0 + $0xb0] sm:$0xff]
    %v44 = vld [vmem:[%s0 + $0xb8] sm:$0xff]
    %v45 = vld [vmem:[%s0 + $0xc0] sm:$0xff]
    %v46 = vld [vmem:[%s0 + $0xc8] sm:$0xff]
    %v47 = vld [vmem:[%s0 + $0xd0] sm:$0xff]
    %v48 = vld [vmem:[%s0 + $0xd8] sm:$0xff]
    %v49 = vld [vmem:[%s0 + $0xe0] sm:$0xff]
    %v50 = vld [vmem:[%s0 + $0xe8] sm:$0xff]
    %v51 = vld [vmem:[%s0 + $0xf0] sm:$0xff]
    %v52 = vld [vmem:[%s0 + $0xf8] sm:$0xff]
    %v53 = vld [vmem:[%s3] sm:$0xff]
    %v54 = vld [vmem:[%s3 + $0x8] sm:$0xff]
    %v55 = vld [vmem:[%s3 + $0x10] sm:$0xff]
    %v56 = vld [vmem:[%s3 + $0x18] sm:$0xff]
    %vm57 = vcmask 261120
    %v59 = vsel %vm57, %v21, 0
    %v62 = vsel %vm57, %v22, 0
    %v65 = vsel %vm57, %v23, 0
    %v68 = vsel %vm57, %v24, 0
    %v71 = vsel %vm57, %v25, 0
    %v74 = vsel %vm57, %v26, 0
    %v77 = vsel %vm57, %v27, 0
    %v80 = vsel %vm57, %v28, 0
    %v83 = vsel %vm57, %v29, 0
    %v86 = vsel %vm57, %v30, 0
    %v89 = vsel %vm57, %v31, 0
    %v92 = vsel %vm57, %v32, 0
    %v95 = vsel %vm57, %v33, 0
    %v98 = vsel %vm57, %v34, 0
    %v101 = vsel %vm57, %v35, 0
    %v104 = vsel %vm57, %v36, 0
    %v107 = vsel %vm57, %v37, 0
    %v110 = vsel %vm57, %v38, 0
    %v113 = vsel %vm57, %v39, 0
    %v116 = vsel %vm57, %v40, 0
    %v119 = vsel %vm57, %v41, 0
    %v122 = vsel %vm57, %v42, 0
    %v125 = vsel %vm57, %v43, 0
    %v128 = vsel %vm57, %v44, 0
    %v131 = vsel %vm57, %v45, 0
    %v134 = vsel %vm57, %v46, 0
    %v137 = vsel %vm57, %v47, 0
    %v140 = vsel %vm57, %v48, 0
    %v143 = vsel %vm57, %v49, 0
    %v146 = vsel %vm57, %v50, 0
    %v149 = vsel %vm57, %v51, 0
    %v152 = vsel %vm57, %v52, 0
    %154 = vmatprep.subr.mxu0 0.0
    %155 = vmatpush1.msra.mxu0 0.0
    %156 = vmatprep.subr.mxu0 0.0
    %157 = vmatpush1.msra.mxu0 0.0
    %158 = vmatprep.subr.mxu0 0.0
    %159 = vmatpush1.msra.mxu0 0.0
    %160 = vmatprep.subr.mxu0 0.0
    %161 = vmatpush1.msra.mxu0 0.0
    %162 = vmatprep.subr.mxu0 0.0
    %163 = vmatpush1.msra.mxu0 0.0
    %164 = vmatprep.subr.mxu0 0.0
    %165 = vmatpush1.msra.mxu0 0.0
    %166 = vmatprep.subr.mxu0 0.0
    %167 = vmatpush1.msra.mxu0 0.0
    %168 = vmatprep.subr.mxu0 0.0
    %169 = vmatpush1.msra.mxu0 0.0
    %170 = vmatprep.subr.mxu0 0.0
    %171 = vmatpush1.msra.mxu0 0.0
    %172 = vmatprep.subr.mxu0 0.0
    %173 = vmatpush1.msra.mxu0 0.0
    %174 = vmatprep.subr.mxu0 0.0
    %175 = vmatpush1.msra.mxu0 0.0
    %176 = vmatprep.subr.mxu0 0.0
    %177 = vmatpush1.msra.mxu0 0.0
    %178 = vmatprep.subr.mxu0 0.0
    %179 = vmatpush1.msra.mxu0 %v56
    %180 = vmatprep.subr.mxu0 0.0
    %181 = vmatpush1.msra.mxu0 %v55
    %182 = vmatprep.subr.mxu0 0.0
    %183 = vmatpush1.msra.mxu0 %v54
    %184 = vmatprep.subr.mxu0 0.0
    %185 = vmatpush1.msra.mxu0 %v53
    %186 = vmatprep.subr.mxu0 0.0
    %187 = vmatpush2.msra.mxu0 0.0
    %188 = vmatprep.subr.mxu0 0.0
    %189 = vmatpush2.msra.mxu0 0.0
    %190 = vmatprep.subr.mxu0 0.0
    %191 = vmatpush2.msra.mxu0 0.0
    %192 = vmatprep.subr.mxu0 0.0
    %193 = vmatpush2.msra.mxu0 0.0
    %194 = vmatprep.subr.mxu0 0.0
    %195 = vmatpush2.msra.mxu0 0.0
    %196 = vmatprep.subr.mxu0 0.0
    %197 = vmatpush2.msra.mxu0 0.0
    %198 = vmatprep.subr.mxu0 0.0
    %199 = vmatpush2.msra.mxu0 0.0
    %200 = vmatprep.subr.mxu0 0.0
    %201 = vmatpush2.msra.mxu0 0.0
    %202 = vmatprep.subr.mxu0 0.0
    %203 = vmatpush2.msra.mxu0 0.0
    %204 = vmatprep.subr.mxu0 0.0
    %205 = vmatpush2.msra.mxu0 0.0
    %206 = vmatprep.subr.mxu0 0.0
    %207 = vmatpush2.msra.mxu0 0.0
    %208 = vmatprep.subr.mxu0 0.0
    %209 = vmatpush2.msra.mxu0 0.0
    %210 = vmatprep.subr.mxu0 0.0
    %211 = vmatpush2.msra.mxu0 0.0
    %212 = vmatprep.subr.mxu0 0.0
    %213 = vmatpush2.msra.mxu0 0.0
    %214 = vmatprep.subr.mxu0 0.0
    %215 = vmatpush2.msra.mxu0 0.0
    %216 = vmatprep.subr.mxu0 0.0
    %217 = vmatpush2.msra.mxu0 0.0
    %218 = vmatprep.mubr.f32.mxu0 0.0
    %219 = vmatmul.mubr.f32.gmra.mxu0 %v59
    %v220 = vpop.f32.mrf.mxu0
    %v221 = vadd.f32 0.0, %v220
    %v222 = vpop.f32.mrf.mxu0
    %223 = vmatprep.mubr.f32.mxu0 0.0
    %224 = vmatmul.mubr.f32.gmra.mxu0 %v62
    %v225 = vpop.f32.mrf.mxu0
    %v226 = vadd.f32 0.0, %v225
    %v227 = vpop.f32.mrf.mxu0
    %228 = vmatprep.mubr.f32.mxu0 0.0
    %229 = vmatmul.mubr.f32.gmra.mxu0 %v65
    %v230 = vpop.f32.mrf.mxu0
    %v231 = vadd.f32 0.0, %v230
    %v232 = vpop.f32.mrf.mxu0
    %233 = vmatprep.mubr.f32.mxu0 0.0
    %234 = vmatmul.mubr.f32.gmra.mxu0 %v68
    %v235 = vpop.f32.mrf.mxu0
    %v236 = vadd.f32 0.0, %v235
    %v237 = vpop.f32.mrf.mxu0
    %238 = vmatprep.mubr.f32.mxu0 0.0
    %239 = vmatmul.mubr.f32.gmra.mxu0 %v71
    %v240 = vpop.f32.mrf.mxu0
    %v241 = vadd.f32 0.0, %v240
    %v242 = vpop.f32.mrf.mxu0
    %243 = vmatprep.mubr.f32.mxu0 0.0
    %244 = vmatmul.mubr.f32.gmra.mxu0 %v74
    %v245 = vpop.f32.mrf.mxu0
    %v246 = vadd.f32 0.0, %v245
    %v247 = vpop.f32.mrf.mxu0
    %248 = vmatprep.mubr.f32.mxu0 0.0
    %249 = vmatmul.mubr.f32.gmra.mxu0 %v77
    %v250 = vpop.f32.mrf.mxu0
    %v251 = vadd.f32 0.0, %v250
    %v252 = vpop.f32.mrf.mxu0
    %253 = vmatprep.mubr.f32.mxu0 0.0
    %254 = vmatmul.mubr.f32.gmra.mxu0 %v80
    %v255 = vpop.f32.mrf.mxu0
    %v256 = vadd.f32 0.0, %v255
    %v257 = vpop.f32.mrf.mxu0
    %258 = vmatprep.mubr.f32.mxu0 0.0
    %259 = vmatmul.mubr.f32.gmra.mxu0 %v83
    %v260 = vpop.f32.mrf.mxu0
    %v261 = vadd.f32 0.0, %v260
    %v262 = vpop.f32.mrf.mxu0
    %263 = vmatprep.mubr.f32.mxu0 0.0
    %264 = vmatmul.mubr.f32.gmra.mxu0 %v86
    %v265 = vpop.f32.mrf.mxu0
    %v266 = vadd.f32 0.0, %v265
    %v267 = vpop.f32.mrf.mxu0
    %268 = vmatprep.mubr.f32.mxu0 0.0
    %269 = vmatmul.mubr.f32.gmra.mxu0 %v89
    %v270 = vpop.f32.mrf.mxu0
    %v271 = vadd.f32 0.0, %v270
    %v272 = vpop.f32.mrf.mxu0
    %273 = vmatprep.mubr.f32.mxu0 0.0
    %274 = vmatmul.mubr.f32.gmra.mxu0 %v92
    %v275 = vpop.f32.mrf.mxu0
    %v276 = vadd.f32 0.0, %v275
    %v277 = vpop.f32.mrf.mxu0
    %278 = vmatprep.mubr.f32.mxu0 0.0
    %279 = vmatmul.mubr.f32.gmra.mxu0 %v95
    %v280 = vpop.f32.mrf.mxu0
    %v281 = vadd.f32 0.0, %v280
    %v282 = vpop.f32.mrf.mxu0
    %283 = vmatprep.mubr.f32.mxu0 0.0
    %284 = vmatmul.mubr.f32.gmra.mxu0 %v98
    %v285 = vpop.f32.mrf.mxu0
    %v286 = vadd.f32 0.0, %v285
    %v287 = vpop.f32.mrf.mxu0
    %288 = vmatprep.mubr.f32.mxu0 0.0
    %289 = vmatmul.mubr.f32.gmra.mxu0 %v101
    %v290 = vpop.f32.mrf.mxu0
    %v291 = vadd.f32 0.0, %v290
    %v292 = vpop.f32.mrf.mxu0
    %293 = vmatprep.mubr.f32.mxu0 0.0
    %294 = vmatmul.mubr.f32.gmra.mxu0 %v104
    %v295 = vpop.f32.mrf.mxu0
    %v296 = vadd.f32 0.0, %v295
    %v297 = vpop.f32.mrf.mxu0
    %298 = vmatprep.mubr.f32.mxu0 0.0
    %299 = vmatmul.mubr.f32.gmra.mxu0 %v107
    %v300 = vpop.f32.mrf.mxu0
    %v301 = vadd.f32 0.0, %v300
    %v302 = vpop.f32.mrf.mxu0
    %303 = vmatprep.mubr.f32.mxu0 0.0
    %304 = vmatmul.mubr.f32.gmra.mxu0 %v110
    %v305 = vpop.f32.mrf.mxu0
    %v306 = vadd.f32 0.0, %v305
    %v307 = vpop.f32.mrf.mxu0
    %308 = vmatprep.mubr.f32.mxu0 0.0
    %309 = vmatmul.mubr.f32.gmra.mxu0 %v113
    %v310 = vpop.f32.mrf.mxu0
    %v311 = vadd.f32 0.0, %v310
    %v312 = vpop.f32.mrf.mxu0
    %313 = vmatprep.mubr.f32.mxu0 0.0
    %314 = vmatmul.mubr.f32.gmra.mxu0 %v116
    %v315 = vpop.f32.mrf.mxu0
    %v316 = vadd.f32 0.0, %v315
    %v317 = vpop.f32.mrf.mxu0
    %318 = vmatprep.mubr.f32.mxu0 0.0
    %319 = vmatmul.mubr.f32.gmra.mxu0 %v119
    %v320 = vpop.f32.mrf.mxu0
    %v321 = vadd.f32 0.0, %v320
    %v322 = vpop.f32.mrf.mxu0
    %323 = vmatprep.mubr.f32.mxu0 0.0
    %324 = vmatmul.mubr.f32.gmra.mxu0 %v122
    %v325 = vpop.f32.mrf.mxu0
    %v326 = vadd.f32 0.0, %v325
    %v327 = vpop.f32.mrf.mxu0
    %328 = vmatprep.mubr.f32.mxu0 0.0
    %329 = vmatmul.mubr.f32.gmra.mxu0 %v125
    %v330 = vpop.f32.mrf.mxu0
    %v331 = vadd.f32 0.0, %v330
    %v332 = vpop.f32.mrf.mxu0
    %333 = vmatprep.mubr.f32.mxu0 0.0
    %334 = vmatmul.mubr.f32.gmra.mxu0 %v128
    %v335 = vpop.f32.mrf.mxu0
    %v336 = vadd.f32 0.0, %v335
    %v337 = vpop.f32.mrf.mxu0
    %338 = vmatprep.mubr.f32.mxu0 0.0
    %339 = vmatmul.mubr.f32.gmra.mxu0 %v131
    %v340 = vpop.f32.mrf.mxu0
    %v341 = vadd.f32 0.0, %v340
    %v342 = vpop.f32.mrf.mxu0
    %343 = vmatprep.mubr.f32.mxu0 0.0
    %344 = vmatmul.mubr.f32.gmra.mxu0 %v134
    %v345 = vpop.f32.mrf.mxu0
    %v346 = vadd.f32 0.0, %v345
    %v347 = vpop.f32.mrf.mxu0
    %348 = vmatprep.mubr.f32.mxu0 0.0
    %349 = vmatmul.mubr.f32.gmra.mxu0 %v137
    %v350 = vpop.f32.mrf.mxu0
    %v351 = vadd.f32 0.0, %v350
    %v352 = vpop.f32.mrf.mxu0
    %353 = vmatprep.mubr.f32.mxu0 0.0
    %354 = vmatmul.mubr.f32.gmra.mxu0 %v140
    %v355 = vpop.f32.mrf.mxu0
    %v356 = vadd.f32 0.0, %v355
    %v357 = vpop.f32.mrf.mxu0
    %358 = vmatprep.mubr.f32.mxu0 0.0
    %359 = vmatmul.mubr.f32.gmra.mxu0 %v143
    %v360 = vpop.f32.mrf.mxu0
    %v361 = vadd.f32 0.0, %v360
    %v362 = vpop.f32.mrf.mxu0
    %363 = vmatprep.mubr.f32.mxu0 0.0
    %364 = vmatmul.mubr.f32.gmra.mxu0 %v146
    %v365 = vpop.f32.mrf.mxu0
    %v366 = vadd.f32 0.0, %v365
    %v367 = vpop.f32.mrf.mxu0
    %368 = vmatprep.mubr.f32.mxu0 0.0
    %369 = vmatmul.mubr.f32.gmra.mxu0 %v149
    %v370 = vpop.f32.mrf.mxu0
    %v371 = vadd.f32 0.0, %v370
    %v372 = vpop.f32.mrf.mxu0
    %373 = vmatprep.mubr.f32.mxu0 0.0
    %374 = vmatmul.mubr.f32.gmra.mxu0 %v152
    %v375 = vpop.f32.mrf.mxu0
    %v376 = vadd.f32 0.0, %v375
    %v377 = vpop.f32.mrf.mxu0
    %378 = vdwg.mxu0
    %v379 = vld [vmem:[%s1] sm:$0xff]
    %v380 = vld [vmem:[%s1 + $0x8] sm:$0xff]
    %v381 = vld [vmem:[%s1 + $0x10] sm:$0xff]
    %v382 = vld [vmem:[%s1 + $0x18] sm:$0xff]
    %v387 = vcombine.high %v379, %v379
    %v389 = vunpack.c.l.s4 1966171168
    %v390 = vunpack.c.0.s8 %v389
    %v391 = vlaneseq
    %v392 = vshrl.u32 %v391, 7
    %v393 = vsub.s32 %v390, %v392
    %v394 = vrot.slane %v379, %v393
    %v396 = vunpack.c.l.s4 1966171168
    %v397 = vunpack.c.0.s8 %v396
    %v398 = vlaneseq
    %v399 = vshrl.u32 %v398, 7
    %v400 = vsub.s32 %v397, %v399
    %v401 = vrot.slane %v387, %v400
    %v402 = vcombine.high %v394, %v394
    %v403 = vcombine.high %v401, %v401
    %v405 = vunpack.c.l.s4 1966171168
    %v406 = vunpack.c.0.s8 %v405
    %v407 = vlaneseq
    %v408 = vshrl.u32 %v407, 7
    %v409 = vsub.s32 %v406, %v408
    %v410 = vrot.slane %v394, %v409
    %v412 = vunpack.c.l.s4 1966171168
    %v413 = vunpack.c.0.s8 %v412
    %v414 = vlaneseq
    %v415 = vshrl.u32 %v414, 7
    %v416 = vsub.s32 %v413, %v415
    %v417 = vrot.slane %v401, %v416
    %v419 = vunpack.c.l.s4 1966171168
    %v420 = vunpack.c.0.s8 %v419
    %v421 = vlaneseq
    %v422 = vshrl.u32 %v421, 7
    %v423 = vsub.s32 %v420, %v422
    %v424 = vrot.slane %v402, %v423
    %v426 = vunpack.c.l.s4 1966171168
    %v427 = vunpack.c.0.s8 %v426
    %v428 = vlaneseq
    %v429 = vshrl.u32 %v428, 7
    %v430 = vsub.s32 %v427, %v429
    %v431 = vrot.slane %v403, %v430
    %v432 = vcombine.high %v410, %v410
    %v433 = vcombine.high %v417, %v417
    %v434 = vcombine.high %v424, %v424
    %v435 = vcombine.high %v431, %v431
    %v436 = vcombine.high %v380, %v380
    %v438 = vunpack.c.l.s4 1966171168
    %v439 = vunpack.c.0.s8 %v438
    %v440 = vlaneseq
    %v441 = vshrl.u32 %v440, 7
    %v442 = vsub.s32 %v439, %v441
    %v443 = vrot.slane %v380, %v442
    %v445 = vunpack.c.l.s4 1966171168
    %v446 = vunpack.c.0.s8 %v445
    %v447 = vlaneseq
    %v448 = vshrl.u32 %v447, 7
    %v449 = vsub.s32 %v446, %v448
    %v450 = vrot.slane %v436, %v449
    %v451 = vcombine.high %v443, %v443
    %v452 = vcombine.high %v450, %v450
    %v454 = vunpack.c.l.s4 1966171168
    %v455 = vunpack.c.0.s8 %v454
    %v456 = vlaneseq
    %v457 = vshrl.u32 %v456, 7
    %v458 = vsub.s32 %v455, %v457
    %v459 = vrot.slane %v443, %v458
    %v461 = vunpack.c.l.s4 1966171168
    %v462 = vunpack.c.0.s8 %v461
    %v463 = vlaneseq
    %v464 = vshrl.u32 %v463, 7
    %v465 = vsub.s32 %v462, %v464
    %v466 = vrot.slane %v450, %v465
    %v468 = vunpack.c.l.s4 1966171168
    %v469 = vunpack.c.0.s8 %v468
    %v470 = vlaneseq
    %v471 = vshrl.u32 %v470, 7
    %v472 = vsub.s32 %v469, %v471
    %v473 = vrot.slane %v451, %v472
    %v475 = vunpack.c.l.s4 1966171168
    %v476 = vunpack.c.0.s8 %v475
    %v477 = vlaneseq
    %v478 = vshrl.u32 %v477, 7
    %v479 = vsub.s32 %v476, %v478
    %v480 = vrot.slane %v452, %v479
    %v481 = vcombine.high %v459, %v459
    %v482 = vcombine.high %v466, %v466
    %v483 = vcombine.high %v473, %v473
    %v484 = vcombine.high %v480, %v480
    %v485 = vcombine.high %v381, %v381
    %v487 = vunpack.c.l.s4 1966171168
    %v488 = vunpack.c.0.s8 %v487
    %v489 = vlaneseq
    %v490 = vshrl.u32 %v489, 7
    %v491 = vsub.s32 %v488, %v490
    %v492 = vrot.slane %v381, %v491
    %v494 = vunpack.c.l.s4 1966171168
    %v495 = vunpack.c.0.s8 %v494
    %v496 = vlaneseq
    %v497 = vshrl.u32 %v496, 7
    %v498 = vsub.s32 %v495, %v497
    %v499 = vrot.slane %v485, %v498
    %v500 = vcombine.high %v492, %v492
    %v501 = vcombine.high %v499, %v499
    %v503 = vunpack.c.l.s4 1966171168
    %v504 = vunpack.c.0.s8 %v503
    %v505 = vlaneseq
    %v506 = vshrl.u32 %v505, 7
    %v507 = vsub.s32 %v504, %v506
    %v508 = vrot.slane %v492, %v507
    %v510 = vunpack.c.l.s4 1966171168
    %v511 = vunpack.c.0.s8 %v510
    %v512 = vlaneseq
    %v513 = vshrl.u32 %v512, 7
    %v514 = vsub.s32 %v511, %v513
    %v515 = vrot.slane %v499, %v514
    %v517 = vunpack.c.l.s4 1966171168
    %v518 = vunpack.c.0.s8 %v517
    %v519 = vlaneseq
    %v520 = vshrl.u32 %v519, 7
    %v521 = vsub.s32 %v518, %v520
    %v522 = vrot.slane %v500, %v521
    %v524 = vunpack.c.l.s4 1966171168
    %v525 = vunpack.c.0.s8 %v524
    %v526 = vlaneseq
    %v527 = vshrl.u32 %v526, 7
    %v528 = vsub.s32 %v525, %v527
    %v529 = vrot.slane %v501, %v528
    %v530 = vcombine.high %v508, %v508
    %v531 = vcombine.high %v515, %v515
    %v532 = vcombine.high %v522, %v522
    %v533 = vcombine.high %v529, %v529
    %v534 = vcombine.high %v382, %v382
    %v536 = vunpack.c.l.s4 1966171168
    %v537 = vunpack.c.0.s8 %v536
    %v538 = vlaneseq
    %v539 = vshrl.u32 %v538, 7
    %v540 = vsub.s32 %v537, %v539
    %v541 = vrot.slane %v382, %v540
    %v543 = vunpack.c.l.s4 1966171168
    %v544 = vunpack.c.0.s8 %v543
    %v545 = vlaneseq
    %v546 = vshrl.u32 %v545, 7
    %v547 = vsub.s32 %v544, %v546
    %v548 = vrot.slane %v534, %v547
    %v549 = vcombine.high %v541, %v541
    %v550 = vcombine.high %v548, %v548
    %v552 = vunpack.c.l.s4 1966171168
    %v553 = vunpack.c.0.s8 %v552
    %v554 = vlaneseq
    %v555 = vshrl.u32 %v554, 7
    %v556 = vsub.s32 %v553, %v555
    %v557 = vrot.slane %v541, %v556
    %v559 = vunpack.c.l.s4 1966171168
    %v560 = vunpack.c.0.s8 %v559
    %v561 = vlaneseq
    %v562 = vshrl.u32 %v561, 7
    %v563 = vsub.s32 %v560, %v562
    %v564 = vrot.slane %v548, %v563
    %v566 = vunpack.c.l.s4 1966171168
    %v567 = vunpack.c.0.s8 %v566
    %v568 = vlaneseq
    %v569 = vshrl.u32 %v568, 7
    %v570 = vsub.s32 %v567, %v569
    %v571 = vrot.slane %v549, %v570
    %v573 = vunpack.c.l.s4 1966171168
    %v574 = vunpack.c.0.s8 %v573
    %v575 = vlaneseq
    %v576 = vshrl.u32 %v575, 7
    %v577 = vsub.s32 %v574, %v576
    %v578 = vrot.slane %v550, %v577
    %v579 = vcombine.high %v557, %v557
    %v580 = vcombine.high %v564, %v564
    %v581 = vcombine.high %v571, %v571
    %v582 = vcombine.high %v578, %v578
    %v583 = vlaneseq
    %v584 = vshrl.u32 %v583, 7
    %v585 = vsub.s32 0, %v584
    %v586 = vrot.slane %v410, %v585
    %v587 = vlaneseq
    %v588 = vshrl.u32 %v587, 7
    %v589 = vsub.s32 0, %v588
    %v590 = vrot.slane %v424, %v589
    %v591 = vlaneseq
    %v592 = vshrl.u32 %v591, 7
    %v593 = vsub.s32 0, %v592
    %v594 = vrot.slane %v432, %v593
    %v595 = vlaneseq
    %v596 = vshrl.u32 %v595, 7
    %v597 = vsub.s32 0, %v596
    %v598 = vrot.slane %v434, %v597
    %v599 = vlaneseq
    %v600 = vshrl.u32 %v599, 7
    %v601 = vsub.s32 0, %v600
    %v602 = vrot.slane %v417, %v601
    %v603 = vlaneseq
    %v604 = vshrl.u32 %v603, 7
    %v605 = vsub.s32 0, %v604
    %v606 = vrot.slane %v431, %v605
    %v607 = vlaneseq
    %v608 = vshrl.u32 %v607, 7
    %v609 = vsub.s32 0, %v608
    %v610 = vrot.slane %v433, %v609
    %v611 = vlaneseq
    %v612 = vshrl.u32 %v611, 7
    %v613 = vsub.s32 0, %v612
    %v614 = vrot.slane %v435, %v613
    %v615 = vlaneseq
    %v616 = vshrl.u32 %v615, 7
    %v617 = vsub.s32 0, %v616
    %v618 = vrot.slane %v459, %v617
    %v619 = vlaneseq
    %v620 = vshrl.u32 %v619, 7
    %v621 = vsub.s32 0, %v620
    %v622 = vrot.slane %v473, %v621
    %v623 = vlaneseq
    %v624 = vshrl.u32 %v623, 7
    %v625 = vsub.s32 0, %v624
    %v626 = vrot.slane %v481, %v625
    %v627 = vlaneseq
    %v628 = vshrl.u32 %v627, 7
    %v629 = vsub.s32 0, %v628
    %v630 = vrot.slane %v483, %v629
    %v631 = vlaneseq
    %v632 = vshrl.u32 %v631, 7
    %v633 = vsub.s32 0, %v632
    %v634 = vrot.slane %v466, %v633
    %v635 = vlaneseq
    %v636 = vshrl.u32 %v635, 7
    %v637 = vsub.s32 0, %v636
    %v638 = vrot.slane %v480, %v637
    %v639 = vlaneseq
    %v640 = vshrl.u32 %v639, 7
    %v641 = vsub.s32 0, %v640
    %v642 = vrot.slane %v482, %v641
    %v643 = vlaneseq
    %v644 = vshrl.u32 %v643, 7
    %v645 = vsub.s32 0, %v644
    %v646 = vrot.slane %v484, %v645
    %v647 = vlaneseq
    %v648 = vshrl.u32 %v647, 7
    %v649 = vsub.s32 0, %v648
    %v650 = vrot.slane %v508, %v649
    %v651 = vlaneseq
    %v652 = vshrl.u32 %v651, 7
    %v653 = vsub.s32 0, %v652
    %v654 = vrot.slane %v522, %v653
    %v655 = vlaneseq
    %v656 = vshrl.u32 %v655, 7
    %v657 = vsub.s32 0, %v656
    %v658 = vrot.slane %v530, %v657
    %v659 = vlaneseq
    %v660 = vshrl.u32 %v659, 7
    %v661 = vsub.s32 0, %v660
    %v662 = vrot.slane %v532, %v661
    %v663 = vlaneseq
    %v664 = vshrl.u32 %v663, 7
    %v665 = vsub.s32 0, %v664
    %v666 = vrot.slane %v515, %v665
    %v667 = vlaneseq
    %v668 = vshrl.u32 %v667, 7
    %v669 = vsub.s32 0, %v668
    %v670 = vrot.slane %v529, %v669
    %v671 = vlaneseq
    %v672 = vshrl.u32 %v671, 7
    %v673 = vsub.s32 0, %v672
    %v674 = vrot.slane %v531, %v673
    %v675 = vlaneseq
    %v676 = vshrl.u32 %v675, 7
    %v677 = vsub.s32 0, %v676
    %v678 = vrot.slane %v533, %v677
    %v679 = vlaneseq
    %v680 = vshrl.u32 %v679, 7
    %v681 = vsub.s32 0, %v680
    %v682 = vrot.slane %v557, %v681
    %v683 = vlaneseq
    %v684 = vshrl.u32 %v683, 7
    %v685 = vsub.s32 0, %v684
    %v686 = vrot.slane %v571, %v685
    %v687 = vlaneseq
    %v688 = vshrl.u32 %v687, 7
    %v689 = vsub.s32 0, %v688
    %v690 = vrot.slane %v579, %v689
    %v691 = vlaneseq
    %v692 = vshrl.u32 %v691, 7
    %v693 = vsub.s32 0, %v692
    %v694 = vrot.slane %v581, %v693
    %v695 = vlaneseq
    %v696 = vshrl.u32 %v695, 7
    %v697 = vsub.s32 0, %v696
    %v698 = vrot.slane %v564, %v697
    %v699 = vlaneseq
    %v700 = vshrl.u32 %v699, 7
    %v701 = vsub.s32 0, %v700
    %v702 = vrot.slane %v578, %v701
    %v703 = vlaneseq
    %v704 = vshrl.u32 %v703, 7
    %v705 = vsub.s32 0, %v704
    %v706 = vrot.slane %v580, %v705
    %v707 = vlaneseq
    %v708 = vshrl.u32 %v707, 7
    %v709 = vsub.s32 0, %v708
    %v710 = vrot.slane %v582, %v709
    %v743 = vadd.f32 %v221, %v586
    %v744 = vadd.f32 %v226, %v590
    %v745 = vadd.f32 %v231, %v594
    %v746 = vadd.f32 %v236, %v598
    %v747 = vadd.f32 %v241, %v602
    %v748 = vadd.f32 %v246, %v606
    %v749 = vadd.f32 %v251, %v610
    %v750 = vadd.f32 %v256, %v614
    %v751 = vadd.f32 %v261, %v618
    %v752 = vadd.f32 %v266, %v622
    %v753 = vadd.f32 %v271, %v626
    %v754 = vadd.f32 %v276, %v630
    %v755 = vadd.f32 %v281, %v634
    %v756 = vadd.f32 %v286, %v638
    %v757 = vadd.f32 %v291, %v642
    %v758 = vadd.f32 %v296, %v646
    %v759 = vadd.f32 %v301, %v650
    %v760 = vadd.f32 %v306, %v654
    %v761 = vadd.f32 %v311, %v658
    %v762 = vadd.f32 %v316, %v662
    %v763 = vadd.f32 %v321, %v666
    %v764 = vadd.f32 %v326, %v670
    %v765 = vadd.f32 %v331, %v674
    %v766 = vadd.f32 %v336, %v678
    %v767 = vadd.f32 %v341, %v682
    %v768 = vadd.f32 %v346, %v686
    %v769 = vadd.f32 %v351, %v690
    %v770 = vadd.f32 %v356, %v694
    %v771 = vadd.f32 %v361, %v698
    %v772 = vadd.f32 %v366, %v702
    %v773 = vadd.f32 %v371, %v706
    %v774 = vadd.f32 %v376, %v710
    %v775 = vtanh.pop %v743
    %v776 = vtanh.pop %v744
    %v777 = vtanh.pop %v745
    %v778 = vtanh.pop %v746
    %v779 = vtanh.pop %v747
    %v780 = vtanh.pop %v748
    %v781 = vtanh.pop %v749
    %v782 = vtanh.pop %v750
    %v783 = vtanh.pop %v751
    %v784 = vtanh.pop %v752
    %v785 = vtanh.pop %v753
    %v786 = vtanh.pop %v754
    %v787 = vtanh.pop %v755
    %v788 = vtanh.pop %v756
    %v789 = vtanh.pop %v757
    %v790 = vtanh.pop %v758
    %v791 = vtanh.pop %v759
    %v792 = vtanh.pop %v760
    %v793 = vtanh.pop %v761
    %v794 = vtanh.pop %v762
    %v795 = vtanh.pop %v763
    %v796 = vtanh.pop %v764
    %v797 = vtanh.pop %v765
    %v798 = vtanh.pop %v766
    %v799 = vtanh.pop %v767
    %v800 = vtanh.pop %v768
    %v801 = vtanh.pop %v769
    %v802 = vtanh.pop %v770
    %v803 = vtanh.pop %v771
    %v804 = vtanh.pop %v772
    %v805 = vtanh.pop %v773
    %v806 = vtanh.pop %v774
    %v807 = vld [vmem:[%s4] sm:$0x1]
    %v809 = vlaneseq
    %v810 = vshrl.u32 %v809, 7
    %v811 = vsub.s32 0, %v810
    %v812 = vrot.slane %v807, %v811
    %v814 = vmul.f32 %v775, %v812
    %v815 = vmul.f32 %v776, %v812
    %v816 = vmul.f32 %v777, %v812
    %v817 = vmul.f32 %v778, %v812
    %v818 = vmul.f32 %v779, %v812
    %v819 = vmul.f32 %v780, %v812
    %v820 = vmul.f32 %v781, %v812
    %v821 = vmul.f32 %v782, %v812
    %v822 = vmul.f32 %v783, %v812
    %v823 = vmul.f32 %v784, %v812
    %v824 = vmul.f32 %v785, %v812
    %v825 = vmul.f32 %v786, %v812
    %v826 = vmul.f32 %v787, %v812
    %v827 = vmul.f32 %v788, %v812
    %v828 = vmul.f32 %v789, %v812
    %v829 = vmul.f32 %v790, %v812
    %v830 = vmul.f32 %v791, %v812
    %v831 = vmul.f32 %v792, %v812
    %v832 = vmul.f32 %v793, %v812
    %v833 = vmul.f32 %v794, %v812
    %v834 = vmul.f32 %v795, %v812
    %v835 = vmul.f32 %v796, %v812
    %v836 = vmul.f32 %v797, %v812
    %v837 = vmul.f32 %v798, %v812
    %v838 = vmul.f32 %v799, %v812
    %v839 = vmul.f32 %v800, %v812
    %v840 = vmul.f32 %v801, %v812
    %v841 = vmul.f32 %v802, %v812
    %v842 = vmul.f32 %v803, %v812
    %v843 = vmul.f32 %v804, %v812
    %v844 = vmul.f32 %v805, %v812
    %v845 = vmul.f32 %v806, %v812
    %846 = vadd.xlane.f32.xlu0 %v814
    %v847 = vpop.xlane.xlu0 %846
    %848 = vadd.xlane.f32.xlu0 %v815
    %v849 = vpop.xlane.xlu0 %848
    %850 = vadd.xlane.f32.xlu0 %v816
    %v851 = vpop.xlane.xlu0 %850
    %852 = vadd.xlane.f32.xlu0 %v817
    %v853 = vpop.xlane.xlu0 %852
    %854 = vadd.xlane.f32.xlu0 %v818
    %v855 = vpop.xlane.xlu0 %854
    %856 = vadd.xlane.f32.xlu0 %v819
    %v857 = vpop.xlane.xlu0 %856
    %858 = vadd.xlane.f32.xlu0 %v820
    %v859 = vpop.xlane.xlu0 %858
    %860 = vadd.xlane.f32.xlu0 %v821
    %v861 = vpop.xlane.xlu0 %860
    %862 = vadd.xlane.f32.xlu0 %v822
    %v863 = vpop.xlane.xlu0 %862
    %864 = vadd.xlane.f32.xlu0 %v823
    %v865 = vpop.xlane.xlu0 %864
    %866 = vadd.xlane.f32.xlu0 %v824
    %v867 = vpop.xlane.xlu0 %866
    %868 = vadd.xlane.f32.xlu0 %v825
    %v869 = vpop.xlane.xlu0 %868
    %870 = vadd.xlane.f32.xlu0 %v826
    %v871 = vpop.xlane.xlu0 %870
    %872 = vadd.xlane.f32.xlu0 %v827
    %v873 = vpop.xlane.xlu0 %872
    %874 = vadd.xlane.f32.xlu0 %v828
    %v875 = vpop.xlane.xlu0 %874
    %876 = vadd.xlane.f32.xlu0 %v829
    %v877 = vpop.xlane.xlu0 %876
    %878 = vadd.xlane.f32.xlu0 %v830
    %v879 = vpop.xlane.xlu0 %878
    %880 = vadd.xlane.f32.xlu0 %v831
    %v881 = vpop.xlane.xlu0 %880
    %882 = vadd.xlane.f32.xlu0 %v832
    %v883 = vpop.xlane.xlu0 %882
    %884 = vadd.xlane.f32.xlu0 %v833
    %v885 = vpop.xlane.xlu0 %884
    %886 = vadd.xlane.f32.xlu0 %v834
    %v887 = vpop.xlane.xlu0 %886
    %888 = vadd.xlane.f32.xlu0 %v835
    %v889 = vpop.xlane.xlu0 %888
    %890 = vadd.xlane.f32.xlu0 %v836
    %v891 = vpop.xlane.xlu0 %890
    %892 = vadd.xlane.f32.xlu0 %v837
    %v893 = vpop.xlane.xlu0 %892
    %894 = vadd.xlane.f32.xlu0 %v838
    %v895 = vpop.xlane.xlu0 %894
    %896 = vadd.xlane.f32.xlu0 %v839
    %v897 = vpop.xlane.xlu0 %896
    %898 = vadd.xlane.f32.xlu0 %v840
    %v899 = vpop.xlane.xlu0 %898
    %900 = vadd.xlane.f32.xlu0 %v841
    %v901 = vpop.xlane.xlu0 %900
    %902 = vadd.xlane.f32.xlu0 %v842
    %v903 = vpop.xlane.xlu0 %902
    %904 = vadd.xlane.f32.xlu0 %v843
    %v905 = vpop.xlane.xlu0 %904
    %906 = vadd.xlane.f32.xlu0 %v844
    %v907 = vpop.xlane.xlu0 %906
    %908 = vadd.xlane.f32.xlu0 %v845
    %v909 = vpop.xlane.xlu0 %908
    %v910 = vlaneseq
    %v911 = vand.u32 %v910, 127
    %v912 = vld [vmem:[%s2] sm:$0xff]
    %v913 = vld [vmem:[%s2 + $0x8] sm:$0xff]
    %v914 = vld [vmem:[%s2 + $0x10] sm:$0xff]
    %v915 = vld [vmem:[%s2 + $0x18] sm:$0xff]
    %916 = vset.pattern.permute.xlu0 0
    %917 = vperm.xlu0 %916, %v912
    %v918 = vpop.permute.xlu0 %917
    %919 = vset.pattern.permute.xlu0 0
    %920 = vperm.xlu0 %919, %v913
    %v921 = vpop.permute.xlu0 %920
    %922 = vset.pattern.permute.xlu0 0
    %923 = vperm.xlu0 %922, %v914
    %v924 = vpop.permute.xlu0 %923
    %925 = vset.pattern.permute.xlu0 0
    %926 = vperm.xlu0 %925, %v915
    %v927 = vpop.permute.xlu0 %926
    %vm928 = vcmp.lt.s32.totalorder %v911, %v918
    %vm929 = vcmp.lt.s32.totalorder %v911, %v921
    %vm930 = vcmp.lt.s32.totalorder %v911, %v924
    %vm931 = vcmp.lt.s32.totalorder %v911, %v927
    %v964 = vlaneseq
    %v965 = vshrl.u32 %v964, 7
    %v966 = vsub.s32 %v911, %v965
    %v967 = vrot.slane %v847, %v966
    %v968 = vlaneseq
    %v969 = vshrl.u32 %v968, 7
    %v970 = vsub.s32 %v911, %v969
    %v971 = vrot.slane %v849, %v970
    %v972 = vlaneseq
    %v973 = vshrl.u32 %v972, 7
    %v974 = vsub.s32 %v911, %v973
    %v975 = vrot.slane %v851, %v974
    %v976 = vlaneseq
    %v977 = vshrl.u32 %v976, 7
    %v978 = vsub.s32 %v911, %v977
    %v979 = vrot.slane %v853, %v978
    %v980 = vlaneseq
    %v981 = vshrl.u32 %v980, 7
    %v982 = vsub.s32 %v911, %v981
    %v983 = vrot.slane %v855, %v982
    %v984 = vlaneseq
    %v985 = vshrl.u32 %v984, 7
    %v986 = vsub.s32 %v911, %v985
    %v987 = vrot.slane %v857, %v986
    %v988 = vlaneseq
    %v989 = vshrl.u32 %v988, 7
    %v990 = vsub.s32 %v911, %v989
    %v991 = vrot.slane %v859, %v990
    %v992 = vlaneseq
    %v993 = vshrl.u32 %v992, 7
    %v994 = vsub.s32 %v911, %v993
    %v995 = vrot.slane %v861, %v994
    %v996 = vlaneseq
    %v997 = vshrl.u32 %v996, 7
    %v998 = vsub.s32 %v911, %v997
    %v999 = vrot.slane %v863, %v998
    %v1000 = vlaneseq
    %v1001 = vshrl.u32 %v1000, 7
    %v1002 = vsub.s32 %v911, %v1001
    %v1003 = vrot.slane %v865, %v1002
    %v1004 = vlaneseq
    %v1005 = vshrl.u32 %v1004, 7
    %v1006 = vsub.s32 %v911, %v1005
    %v1007 = vrot.slane %v867, %v1006
    %v1008 = vlaneseq
    %v1009 = vshrl.u32 %v1008, 7
    %v1010 = vsub.s32 %v911, %v1009
    %v1011 = vrot.slane %v869, %v1010
    %v1012 = vlaneseq
    %v1013 = vshrl.u32 %v1012, 7
    %v1014 = vsub.s32 %v911, %v1013
    %v1015 = vrot.slane %v871, %v1014
    %v1016 = vlaneseq
    %v1017 = vshrl.u32 %v1016, 7
    %v1018 = vsub.s32 %v911, %v1017
    %v1019 = vrot.slane %v873, %v1018
    %v1020 = vlaneseq
    %v1021 = vshrl.u32 %v1020, 7
    %v1022 = vsub.s32 %v911, %v1021
    %v1023 = vrot.slane %v875, %v1022
    %v1024 = vlaneseq
    %v1025 = vshrl.u32 %v1024, 7
    %v1026 = vsub.s32 %v911, %v1025
    %v1027 = vrot.slane %v877, %v1026
    %v1028 = vlaneseq
    %v1029 = vshrl.u32 %v1028, 7
    %v1030 = vsub.s32 %v911, %v1029
    %v1031 = vrot.slane %v879, %v1030
    %v1032 = vlaneseq
    %v1033 = vshrl.u32 %v1032, 7
    %v1034 = vsub.s32 %v911, %v1033
    %v1035 = vrot.slane %v881, %v1034
    %v1036 = vlaneseq
    %v1037 = vshrl.u32 %v1036, 7
    %v1038 = vsub.s32 %v911, %v1037
    %v1039 = vrot.slane %v883, %v1038
    %v1040 = vlaneseq
    %v1041 = vshrl.u32 %v1040, 7
    %v1042 = vsub.s32 %v911, %v1041
    %v1043 = vrot.slane %v885, %v1042
    %v1044 = vlaneseq
    %v1045 = vshrl.u32 %v1044, 7
    %v1046 = vsub.s32 %v911, %v1045
    %v1047 = vrot.slane %v887, %v1046
    %v1048 = vlaneseq
    %v1049 = vshrl.u32 %v1048, 7
    %v1050 = vsub.s32 %v911, %v1049
    %v1051 = vrot.slane %v889, %v1050
    %v1052 = vlaneseq
    %v1053 = vshrl.u32 %v1052, 7
    %v1054 = vsub.s32 %v911, %v1053
    %v1055 = vrot.slane %v891, %v1054
    %v1056 = vlaneseq
    %v1057 = vshrl.u32 %v1056, 7
    %v1058 = vsub.s32 %v911, %v1057
    %v1059 = vrot.slane %v893, %v1058
    %v1060 = vlaneseq
    %v1061 = vshrl.u32 %v1060, 7
    %v1062 = vsub.s32 %v911, %v1061
    %v1063 = vrot.slane %v895, %v1062
    %v1064 = vlaneseq
    %v1065 = vshrl.u32 %v1064, 7
    %v1066 = vsub.s32 %v911, %v1065
    %v1067 = vrot.slane %v897, %v1066
    %v1068 = vlaneseq
    %v1069 = vshrl.u32 %v1068, 7
    %v1070 = vsub.s32 %v911, %v1069
    %v1071 = vrot.slane %v899, %v1070
    %v1072 = vlaneseq
    %v1073 = vshrl.u32 %v1072, 7
    %v1074 = vsub.s32 %v911, %v1073
    %v1075 = vrot.slane %v901, %v1074
    %v1076 = vlaneseq
    %v1077 = vshrl.u32 %v1076, 7
    %v1078 = vsub.s32 %v911, %v1077
    %v1079 = vrot.slane %v903, %v1078
    %v1080 = vlaneseq
    %v1081 = vshrl.u32 %v1080, 7
    %v1082 = vsub.s32 %v911, %v1081
    %v1083 = vrot.slane %v905, %v1082
    %v1084 = vlaneseq
    %v1085 = vshrl.u32 %v1084, 7
    %v1086 = vsub.s32 %v911, %v1085
    %v1087 = vrot.slane %v907, %v1086
    %v1088 = vlaneseq
    %v1089 = vshrl.u32 %v1088, 7
    %v1090 = vsub.s32 %v911, %v1089
    %v1091 = vrot.slane %v909, %v1090
    %vm1092 = vcmask 1041409
    %v1093 = vsel %vm1092, %v971, %v967
    %vm1094 = vcmask 1042434
    %v1095 = vsel %vm1094, %v975, %v1093
    %vm1096 = vcmask 1043459
    %v1097 = vsel %vm1096, %v979, %v1095
    %vm1098 = vcmask 1044484
    %v1099 = vsel %vm1098, %v983, %v1097
    %vm1100 = vcmask 1045509
    %v1101 = vsel %vm1100, %v987, %v1099
    %vm1102 = vcmask 1046534
    %v1103 = vsel %vm1102, %v991, %v1101
    %vm1104 = vcmask 1047559
    %v1105 = vsel %vm1104, %v995, %v1103
    %v1106 = vsel %vm1092, %v1003, %v999
    %v1107 = vsel %vm1094, %v1007, %v1106
    %v1108 = vsel %vm1096, %v1011, %v1107
    %v1109 = vsel %vm1098, %v1015, %v1108
    %v1110 = vsel %vm1100, %v1019, %v1109
    %v1111 = vsel %vm1102, %v1023, %v1110
    %v1112 = vsel %vm1104, %v1027, %v1111
    %v1113 = vsel %vm1092, %v1035, %v1031
    %v1114 = vsel %vm1094, %v1039, %v1113
    %v1115 = vsel %vm1096, %v1043, %v1114
    %v1116 = vsel %vm1098, %v1047, %v1115
    %v1117 = vsel %vm1100, %v1051, %v1116
    %v1118 = vsel %vm1102, %v1055, %v1117
    %v1119 = vsel %vm1104, %v1059, %v1118
    %v1120 = vsel %vm1092, %v1067, %v1063
    %v1121 = vsel %vm1094, %v1071, %v1120
    %v1122 = vsel %vm1096, %v1075, %v1121
    %v1123 = vsel %vm1098, %v1079, %v1122
    %v1124 = vsel %vm1100, %v1083, %v1123
    %v1125 = vsel %vm1102, %v1087, %v1124
    %v1126 = vsel %vm1104, %v1091, %v1125
    %v1131 = vsel %vm928, %v1105, -inf
    %v1132 = vsel %vm929, %v1112, -inf
    %v1133 = vsel %vm930, %v1119, -inf
    %v1134 = vsel %vm931, %v1126, -inf
    %v1135 = vmul.f32 %v1131, 1.442695
    %v1136 = vpow.pop %v1135
    %v1137 = vmul.f32 %v1132, 1.442695
    %v1138 = vpow.pop %v1137
    %v1139 = vmul.f32 %v1133, 1.442695
    %v1140 = vpow.pop %v1139
    %v1141 = vmul.f32 %v1134, 1.442695
    %v1142 = vpow.pop %v1141
    %vm1143 = vcmask 64512
    %v1144 = vsel %vm1143, %v1136, 0.0
    %1145 = vadd.xlane.f32.xlu0 %v1144
    %v1146 = vpop.xlane.xlu0 %1145
    %v1147 = vsel %vm1143, %v1138, 0.0
    %1148 = vadd.xlane.f32.xlu0 %v1147
    %v1149 = vpop.xlane.xlu0 %1148
    %v1150 = vsel %vm1143, %v1140, 0.0
    %1151 = vadd.xlane.f32.xlu0 %v1150
    %v1152 = vpop.xlane.xlu0 %1151
    %v1153 = vsel %vm1143, %v1142, 0.0
    %1154 = vadd.xlane.f32.xlu0 %v1153
    %v1155 = vpop.xlane.xlu0 %1154
    %v1156 = vrcp.pop %v1146
    %v1157 = vmul.f32 %v1136, %v1156
    %v1158 = vrcp.pop %v1149
    %v1159 = vmul.f32 %v1138, %v1158
    %v1160 = vrcp.pop %v1152
    %v1161 = vmul.f32 %v1140, %v1160
    %v1162 = vrcp.pop %v1155
    %v1163 = vmul.f32 %v1142, %v1162
    %v1164 = vlaneseq
    %v1165 = vshrl.u32 %v1164, 7
    %v1166 = vsub.s32 0, %v1165
    %v1167 = vrot.slane %v1157, %v1166
    %1169 = vbcast.lane.b32.xlu0 %v1167, 256
    %v1170 = vpop.permute.xlu0 %1169
    %v1171 = vlaneseq
    %v1172 = vshrl.u32 %v1171, 7
    %v1173 = vsub.s32 1, %v1172
    %v1174 = vrot.slane %v1157, %v1173
    %1176 = vbcast.lane.b32.xlu0 %v1174, 256
    %v1177 = vpop.permute.xlu0 %1176
    %v1178 = vlaneseq
    %v1179 = vshrl.u32 %v1178, 7
    %v1180 = vsub.s32 2, %v1179
    %v1181 = vrot.slane %v1157, %v1180
    %1183 = vbcast.lane.b32.xlu0 %v1181, 256
    %v1184 = vpop.permute.xlu0 %1183
    %v1185 = vlaneseq
    %v1186 = vshrl.u32 %v1185, 7
    %v1187 = vsub.s32 3, %v1186
    %v1188 = vrot.slane %v1157, %v1187
    %1190 = vbcast.lane.b32.xlu0 %v1188, 256
    %v1191 = vpop.permute.xlu0 %1190
    %v1192 = vlaneseq
    %v1193 = vshrl.u32 %v1192, 7
    %v1194 = vsub.s32 4, %v1193
    %v1195 = vrot.slane %v1157, %v1194
    %1197 = vbcast.lane.b32.xlu0 %v1195, 256
    %v1198 = vpop.permute.xlu0 %1197
    %v1199 = vlaneseq
    %v1200 = vshrl.u32 %v1199, 7
    %v1201 = vsub.s32 5, %v1200
    %v1202 = vrot.slane %v1157, %v1201
    %1204 = vbcast.lane.b32.xlu0 %v1202, 256
    %v1205 = vpop.permute.xlu0 %1204
    %v1206 = vlaneseq
    %v1207 = vshrl.u32 %v1206, 7
    %v1208 = vsub.s32 6, %v1207
    %v1209 = vrot.slane %v1157, %v1208
    %1211 = vbcast.lane.b32.xlu0 %v1209, 256
    %v1212 = vpop.permute.xlu0 %1211
    %v1213 = vlaneseq
    %v1214 = vshrl.u32 %v1213, 7
    %v1215 = vsub.s32 7, %v1214
    %v1216 = vrot.slane %v1157, %v1215
    %1218 = vbcast.lane.b32.xlu0 %v1216, 256
    %v1219 = vpop.permute.xlu0 %1218
    %v1220 = vmul.f32 %v1170, %v21
    %v1221 = vmul.f32 %v1177, %v22
    %v1222 = vmul.f32 %v1184, %v23
    %v1223 = vmul.f32 %v1191, %v24
    %v1224 = vmul.f32 %v1198, %v25
    %v1225 = vmul.f32 %v1205, %v26
    %v1226 = vmul.f32 %v1212, %v27
    %v1227 = vmul.f32 %v1219, %v28
    %v1228 = vsel %vm57, %v1220, 0.0
    %v1229 = vrot.slane %v1228, 4
    %v1230 = vadd.f32 %v1228, %v1229
    %v1231 = vrot.slane %v1230, 2
    %v1232 = vadd.f32 %v1230, %v1231
    %v1233 = vrot.slane %v1232, 1
    %v1234 = vadd.f32 %v1232, %v1233
    %v1235 = vsel %vm57, %v1221, 0.0
    %v1236 = vrot.slane %v1235, 4
    %v1237 = vadd.f32 %v1235, %v1236
    %v1238 = vrot.slane %v1237, 2
    %v1239 = vadd.f32 %v1237, %v1238
    %v1240 = vrot.slane %v1239, 1
    %v1241 = vadd.f32 %v1239, %v1240
    %v1242 = vsel %vm57, %v1222, 0.0
    %v1243 = vrot.slane %v1242, 4
    %v1244 = vadd.f32 %v1242, %v1243
    %v1245 = vrot.slane %v1244, 2
    %v1246 = vadd.f32 %v1244, %v1245
    %v1247 = vrot.slane %v1246, 1
    %v1248 = vadd.f32 %v1246, %v1247
    %v1249 = vsel %vm57, %v1223, 0.0
    %v1250 = vrot.slane %v1249, 4
    %v1251 = vadd.f32 %v1249, %v1250
    %v1252 = vrot.slane %v1251, 2
    %v1253 = vadd.f32 %v1251, %v1252
    %v1254 = vrot.slane %v1253, 1
    %v1255 = vadd.f32 %v1253, %v1254
    %v1256 = vsel %vm57, %v1224, 0.0
    %v1257 = vrot.slane %v1256, 4
    %v1258 = vadd.f32 %v1256, %v1257
    %v1259 = vrot.slane %v1258, 2
    %v1260 = vadd.f32 %v1258, %v1259
    %v1261 = vrot.slane %v1260, 1
    %v1262 = vadd.f32 %v1260, %v1261
    %v1263 = vsel %vm57, %v1225, 0.0
    %v1264 = vrot.slane %v1263, 4
    %v1265 = vadd.f32 %v1263, %v1264
    %v1266 = vrot.slane %v1265, 2
    %v1267 = vadd.f32 %v1265, %v1266
    %v1268 = vrot.slane %v1267, 1
    %v1269 = vadd.f32 %v1267, %v1268
    %v1270 = vsel %vm57, %v1226, 0.0
    %v1271 = vrot.slane %v1270, 4
    %v1272 = vadd.f32 %v1270, %v1271
    %v1273 = vrot.slane %v1272, 2
    %v1274 = vadd.f32 %v1272, %v1273
    %v1275 = vrot.slane %v1274, 1
    %v1276 = vadd.f32 %v1274, %v1275
    %v1277 = vsel %vm57, %v1227, 0.0
    %v1278 = vrot.slane %v1277, 4
    %v1279 = vadd.f32 %v1277, %v1278
    %v1280 = vrot.slane %v1279, 2
    %v1281 = vadd.f32 %v1279, %v1280
    %v1282 = vrot.slane %v1281, 1
    %v1283 = vadd.f32 %v1281, %v1282
    %v1292 = vsel %vm1092, %v1241, %v1234
    %v1293 = vsel %vm1094, %v1248, %v1292
    %v1294 = vsel %vm1096, %v1255, %v1293
    %v1295 = vsel %vm1098, %v1262, %v1294
    %v1296 = vsel %vm1100, %v1269, %v1295
    %v1297 = vsel %vm1102, %v1276, %v1296
    %v1298 = vsel %vm1104, %v1283, %v1297
    %1300 = vst.msk [vmem:[#allocation2] sm:$0xff] %vm57, %v1298
    %v1301 = vlaneseq
    %v1302 = vshrl.u32 %v1301, 7
    %v1303 = vsub.s32 0, %v1302
    %v1304 = vrot.slane %v1159, %v1303
    %1306 = vbcast.lane.b32.xlu0 %v1304, 256
    %v1307 = vpop.permute.xlu0 %1306
    %v1308 = vlaneseq
    %v1309 = vshrl.u32 %v1308, 7
    %v1310 = vsub.s32 1, %v1309
    %v1311 = vrot.slane %v1159, %v1310
    %1313 = vbcast.lane.b32.xlu0 %v1311, 256
    %v1314 = vpop.permute.xlu0 %1313
    %v1315 = vlaneseq
    %v1316 = vshrl.u32 %v1315, 7
    %v1317 = vsub.s32 2, %v1316
    %v1318 = vrot.slane %v1159, %v1317
    %1320 = vbcast.lane.b32.xlu0 %v1318, 256
    %v1321 = vpop.permute.xlu0 %1320
    %v1322 = vlaneseq
    %v1323 = vshrl.u32 %v1322, 7
    %v1324 = vsub.s32 3, %v1323
    %v1325 = vrot.slane %v1159, %v1324
    %1327 = vbcast.lane.b32.xlu0 %v1325, 256
    %v1328 = vpop.permute.xlu0 %1327
    %v1329 = vlaneseq
    %v1330 = vshrl.u32 %v1329, 7
    %v1331 = vsub.s32 4, %v1330
    %v1332 = vrot.slane %v1159, %v1331
    %1334 = vbcast.lane.b32.xlu0 %v1332, 256
    %v1335 = vpop.permute.xlu0 %1334
    %v1336 = vlaneseq
    %v1337 = vshrl.u32 %v1336, 7
    %v1338 = vsub.s32 5, %v1337
    %v1339 = vrot.slane %v1159, %v1338
    %1341 = vbcast.lane.b32.xlu0 %v1339, 256
    %v1342 = vpop.permute.xlu0 %1341
    %v1343 = vlaneseq
    %v1344 = vshrl.u32 %v1343, 7
    %v1345 = vsub.s32 6, %v1344
    %v1346 = vrot.slane %v1159, %v1345
    %1348 = vbcast.lane.b32.xlu0 %v1346, 256
    %v1349 = vpop.permute.xlu0 %1348
    %v1350 = vlaneseq
    %v1351 = vshrl.u32 %v1350, 7
    %v1352 = vsub.s32 7, %v1351
    %v1353 = vrot.slane %v1159, %v1352
    %1355 = vbcast.lane.b32.xlu0 %v1353, 256
    %v1356 = vpop.permute.xlu0 %1355
    %v1357 = vmul.f32 %v1307, %v29
    %v1358 = vmul.f32 %v1314, %v30
    %v1359 = vmul.f32 %v1321, %v31
    %v1360 = vmul.f32 %v1328, %v32
    %v1361 = vmul.f32 %v1335, %v33
    %v1362 = vmul.f32 %v1342, %v34
    %v1363 = vmul.f32 %v1349, %v35
    %v1364 = vmul.f32 %v1356, %v36
    %v1365 = vsel %vm57, %v1357, 0.0
    %v1366 = vrot.slane %v1365, 4
    %v1367 = vadd.f32 %v1365, %v1366
    %v1368 = vrot.slane %v1367, 2
    %v1369 = vadd.f32 %v1367, %v1368
    %v1370 = vrot.slane %v1369, 1
    %v1371 = vadd.f32 %v1369, %v1370
    %v1372 = vsel %vm57, %v1358, 0.0
    %v1373 = vrot.slane %v1372, 4
    %v1374 = vadd.f32 %v1372, %v1373
    %v1375 = vrot.slane %v1374, 2
    %v1376 = vadd.f32 %v1374, %v1375
    %v1377 = vrot.slane %v1376, 1
    %v1378 = vadd.f32 %v1376, %v1377
    %v1379 = vsel %vm57, %v1359, 0.0
    %v1380 = vrot.slane %v1379, 4
    %v1381 = vadd.f32 %v1379, %v1380
    %v1382 = vrot.slane %v1381, 2
    %v1383 = vadd.f32 %v1381, %v1382
    %v1384 = vrot.slane %v1383, 1
    %v1385 = vadd.f32 %v1383, %v1384
    %v1386 = vsel %vm57, %v1360, 0.0
    %v1387 = vrot.slane %v1386, 4
    %v1388 = vadd.f32 %v1386, %v1387
    %v1389 = vrot.slane %v1388, 2
    %v1390 = vadd.f32 %v1388, %v1389
    %v1391 = vrot.slane %v1390, 1
    %v1392 = vadd.f32 %v1390, %v1391
    %v1393 = vsel %vm57, %v1361, 0.0
    %v1394 = vrot.slane %v1393, 4
    %v1395 = vadd.f32 %v1393, %v1394
    %v1396 = vrot.slane %v1395, 2
    %v1397 = vadd.f32 %v1395, %v1396
    %v1398 = vrot.slane %v1397, 1
    %v1399 = vadd.f32 %v1397, %v1398
    %v1400 = vsel %vm57, %v1362, 0.0
    %v1401 = vrot.slane %v1400, 4
    %v1402 = vadd.f32 %v1400, %v1401
    %v1403 = vrot.slane %v1402, 2
    %v1404 = vadd.f32 %v1402, %v1403
    %v1405 = vrot.slane %v1404, 1
    %v1406 = vadd.f32 %v1404, %v1405
    %v1407 = vsel %vm57, %v1363, 0.0
    %v1408 = vrot.slane %v1407, 4
    %v1409 = vadd.f32 %v1407, %v1408
    %v1410 = vrot.slane %v1409, 2
    %v1411 = vadd.f32 %v1409, %v1410
    %v1412 = vrot.slane %v1411, 1
    %v1413 = vadd.f32 %v1411, %v1412
    %v1414 = vsel %vm57, %v1364, 0.0
    %v1415 = vrot.slane %v1414, 4
    %v1416 = vadd.f32 %v1414, %v1415
    %v1417 = vrot.slane %v1416, 2
    %v1418 = vadd.f32 %v1416, %v1417
    %v1419 = vrot.slane %v1418, 1
    %v1420 = vadd.f32 %v1418, %v1419
    %v1429 = vsel %vm1092, %v1378, %v1371
    %v1430 = vsel %vm1094, %v1385, %v1429
    %v1431 = vsel %vm1096, %v1392, %v1430
    %v1432 = vsel %vm1098, %v1399, %v1431
    %v1433 = vsel %vm1100, %v1406, %v1432
    %v1434 = vsel %vm1102, %v1413, %v1433
    %v1435 = vsel %vm1104, %v1420, %v1434
    %1436 = vrot.lane.b32.xlu0 %v1435, 32
    %v1437 = vpop.permute.xlu0 %1436
    %vm1439 = vcmask 523520
    %1440 = vst.msk [vmem:[#allocation2] sm:$0xff] %vm1439, %v1437
    %v1441 = vlaneseq
    %v1442 = vshrl.u32 %v1441, 7
    %v1443 = vsub.s32 0, %v1442
    %v1444 = vrot.slane %v1161, %v1443
    %1446 = vbcast.lane.b32.xlu0 %v1444, 256
    %v1447 = vpop.permute.xlu0 %1446
    %v1448 = vlaneseq
    %v1449 = vshrl.u32 %v1448, 7
    %v1450 = vsub.s32 1, %v1449
    %v1451 = vrot.slane %v1161, %v1450
    %1453 = vbcast.lane.b32.xlu0 %v1451, 256
    %v1454 = vpop.permute.xlu0 %1453
    %v1455 = vlaneseq
    %v1456 = vshrl.u32 %v1455, 7
    %v1457 = vsub.s32 2, %v1456
    %v1458 = vrot.slane %v1161, %v1457
    %1460 = vbcast.lane.b32.xlu0 %v1458, 256
    %v1461 = vpop.permute.xlu0 %1460
    %v1462 = vlaneseq
    %v1463 = vshrl.u32 %v1462, 7
    %v1464 = vsub.s32 3, %v1463
    %v1465 = vrot.slane %v1161, %v1464
    %1467 = vbcast.lane.b32.xlu0 %v1465, 256
    %v1468 = vpop.permute.xlu0 %1467
    %v1469 = vlaneseq
    %v1470 = vshrl.u32 %v1469, 7
    %v1471 = vsub.s32 4, %v1470
    %v1472 = vrot.slane %v1161, %v1471
    %1474 = vbcast.lane.b32.xlu0 %v1472, 256
    %v1475 = vpop.permute.xlu0 %1474
    %v1476 = vlaneseq
    %v1477 = vshrl.u32 %v1476, 7
    %v1478 = vsub.s32 5, %v1477
    %v1479 = vrot.slane %v1161, %v1478
    %1481 = vbcast.lane.b32.xlu0 %v1479, 256
    %v1482 = vpop.permute.xlu0 %1481
    %v1483 = vlaneseq
    %v1484 = vshrl.u32 %v1483, 7
    %v1485 = vsub.s32 6, %v1484
    %v1486 = vrot.slane %v1161, %v1485
    %1488 = vbcast.lane.b32.xlu0 %v1486, 256
    %v1489 = vpop.permute.xlu0 %1488
    %v1490 = vlaneseq
    %v1491 = vshrl.u32 %v1490, 7
    %v1492 = vsub.s32 7, %v1491
    %v1493 = vrot.slane %v1161, %v1492
    %1495 = vbcast.lane.b32.xlu0 %v1493, 256
    %v1496 = vpop.permute.xlu0 %1495
    %v1497 = vmul.f32 %v1447, %v37
    %v1498 = vmul.f32 %v1454, %v38
    %v1499 = vmul.f32 %v1461, %v39
    %v1500 = vmul.f32 %v1468, %v40
    %v1501 = vmul.f32 %v1475, %v41
    %v1502 = vmul.f32 %v1482, %v42
    %v1503 = vmul.f32 %v1489, %v43
    %v1504 = vmul.f32 %v1496, %v44
    %v1505 = vsel %vm57, %v1497, 0.0
    %v1506 = vrot.slane %v1505, 4
    %v1507 = vadd.f32 %v1505, %v1506
    %v1508 = vrot.slane %v1507, 2
    %v1509 = vadd.f32 %v1507, %v1508
    %v1510 = vrot.slane %v1509, 1
    %v1511 = vadd.f32 %v1509, %v1510
    %v1512 = vsel %vm57, %v1498, 0.0
    %v1513 = vrot.slane %v1512, 4
    %v1514 = vadd.f32 %v1512, %v1513
    %v1515 = vrot.slane %v1514, 2
    %v1516 = vadd.f32 %v1514, %v1515
    %v1517 = vrot.slane %v1516, 1
    %v1518 = vadd.f32 %v1516, %v1517
    %v1519 = vsel %vm57, %v1499, 0.0
    %v1520 = vrot.slane %v1519, 4
    %v1521 = vadd.f32 %v1519, %v1520
    %v1522 = vrot.slane %v1521, 2
    %v1523 = vadd.f32 %v1521, %v1522
    %v1524 = vrot.slane %v1523, 1
    %v1525 = vadd.f32 %v1523, %v1524
    %v1526 = vsel %vm57, %v1500, 0.0
    %v1527 = vrot.slane %v1526, 4
    %v1528 = vadd.f32 %v1526, %v1527
    %v1529 = vrot.slane %v1528, 2
    %v1530 = vadd.f32 %v1528, %v1529
    %v1531 = vrot.slane %v1530, 1
    %v1532 = vadd.f32 %v1530, %v1531
    %v1533 = vsel %vm57, %v1501, 0.0
    %v1534 = vrot.slane %v1533, 4
    %v1535 = vadd.f32 %v1533, %v1534
    %v1536 = vrot.slane %v1535, 2
    %v1537 = vadd.f32 %v1535, %v1536
    %v1538 = vrot.slane %v1537, 1
    %v1539 = vadd.f32 %v1537, %v1538
    %v1540 = vsel %vm57, %v1502, 0.0
    %v1541 = vrot.slane %v1540, 4
    %v1542 = vadd.f32 %v1540, %v1541
    %v1543 = vrot.slane %v1542, 2
    %v1544 = vadd.f32 %v1542, %v1543
    %v1545 = vrot.slane %v1544, 1
    %v1546 = vadd.f32 %v1544, %v1545
    %v1547 = vsel %vm57, %v1503, 0.0
    %v1548 = vrot.slane %v1547, 4
    %v1549 = vadd.f32 %v1547, %v1548
    %v1550 = vrot.slane %v1549, 2
    %v1551 = vadd.f32 %v1549, %v1550
    %v1552 = vrot.slane %v1551, 1
    %v1553 = vadd.f32 %v1551, %v1552
    %v1554 = vsel %vm57, %v1504, 0.0
    %v1555 = vrot.slane %v1554, 4
    %v1556 = vadd.f32 %v1554, %v1555
    %v1557 = vrot.slane %v1556, 2
    %v1558 = vadd.f32 %v1556, %v1557
    %v1559 = vrot.slane %v1558, 1
    %v1560 = vadd.f32 %v1558, %v1559
    %v1569 = vsel %vm1092, %v1518, %v1511
    %v1570 = vsel %vm1094, %v1525, %v1569
    %v1571 = vsel %vm1096, %v1532, %v1570
    %v1572 = vsel %vm1098, %v1539, %v1571
    %v1573 = vsel %vm1100, %v1546, %v1572
    %v1574 = vsel %vm1102, %v1553, %v1573
    %v1575 = vsel %vm1104, %v1560, %v1574
    %1576 = vrot.lane.b32.xlu0 %v1575, 64
    %v1577 = vpop.permute.xlu0 %1576
    %vm1579 = vcmask 785920
    %1580 = vst.msk [vmem:[#allocation2] sm:$0xff] %vm1579, %v1577
    %v1581 = vlaneseq
    %v1582 = vshrl.u32 %v1581, 7
    %v1583 = vsub.s32 0, %v1582
    %v1584 = vrot.slane %v1163, %v1583
    %1586 = vbcast.lane.b32.xlu0 %v1584, 256
    %v1587 = vpop.permute.xlu0 %1586
    %v1588 = vlaneseq
    %v1589 = vshrl.u32 %v1588, 7
    %v1590 = vsub.s32 1, %v1589
    %v1591 = vrot.slane %v1163, %v1590
    %1593 = vbcast.lane.b32.xlu0 %v1591, 256
    %v1594 = vpop.permute.xlu0 %1593
    %v1595 = vlaneseq
    %v1596 = vshrl.u32 %v1595, 7
    %v1597 = vsub.s32 2, %v1596
    %v1598 = vrot.slane %v1163, %v1597
    %1600 = vbcast.lane.b32.xlu0 %v1598, 256
    %v1601 = vpop.permute.xlu0 %1600
    %v1602 = vlaneseq
    %v1603 = vshrl.u32 %v1602, 7
    %v1604 = vsub.s32 3, %v1603
    %v1605 = vrot.slane %v1163, %v1604
    %1607 = vbcast.lane.b32.xlu0 %v1605, 256
    %v1608 = vpop.permute.xlu0 %1607
    %v1609 = vlaneseq
    %v1610 = vshrl.u32 %v1609, 7
    %v1611 = vsub.s32 4, %v1610
    %v1612 = vrot.slane %v1163, %v1611
    %1614 = vbcast.lane.b32.xlu0 %v1612, 256
    %v1615 = vpop.permute.xlu0 %1614
    %v1616 = vlaneseq
    %v1617 = vshrl.u32 %v1616, 7
    %v1618 = vsub.s32 5, %v1617
    %v1619 = vrot.slane %v1163, %v1618
    %1621 = vbcast.lane.b32.xlu0 %v1619, 256
    %v1622 = vpop.permute.xlu0 %1621
    %v1623 = vlaneseq
    %v1624 = vshrl.u32 %v1623, 7
    %v1625 = vsub.s32 6, %v1624
    %v1626 = vrot.slane %v1163, %v1625
    %1628 = vbcast.lane.b32.xlu0 %v1626, 256
    %v1629 = vpop.permute.xlu0 %1628
    %v1630 = vlaneseq
    %v1631 = vshrl.u32 %v1630, 7
    %v1632 = vsub.s32 7, %v1631
    %v1633 = vrot.slane %v1163, %v1632
    %1635 = vbcast.lane.b32.xlu0 %v1633, 256
    %v1636 = vpop.permute.xlu0 %1635
    %v1637 = vmul.f32 %v1587, %v45
    %v1638 = vmul.f32 %v1594, %v46
    %v1639 = vmul.f32 %v1601, %v47
    %v1640 = vmul.f32 %v1608, %v48
    %v1641 = vmul.f32 %v1615, %v49
    %v1642 = vmul.f32 %v1622, %v50
    %v1643 = vmul.f32 %v1629, %v51
    %v1644 = vmul.f32 %v1636, %v52
    %v1645 = vsel %vm57, %v1637, 0.0
    %v1646 = vrot.slane %v1645, 4
    %v1647 = vadd.f32 %v1645, %v1646
    %v1648 = vrot.slane %v1647, 2
    %v1649 = vadd.f32 %v1647, %v1648
    %v1650 = vrot.slane %v1649, 1
    %v1651 = vadd.f32 %v1649, %v1650
    %v1652 = vsel %vm57, %v1638, 0.0
    %v1653 = vrot.slane %v1652, 4
    %v1654 = vadd.f32 %v1652, %v1653
    %v1655 = vrot.slane %v1654, 2
    %v1656 = vadd.f32 %v1654, %v1655
    %v1657 = vrot.slane %v1656, 1
    %v1658 = vadd.f32 %v1656, %v1657
    %v1659 = vsel %vm57, %v1639, 0.0
    %v1660 = vrot.slane %v1659, 4
    %v1661 = vadd.f32 %v1659, %v1660
    %v1662 = vrot.slane %v1661, 2
    %v1663 = vadd.f32 %v1661, %v1662
    %v1664 = vrot.slane %v1663, 1
    %v1665 = vadd.f32 %v1663, %v1664
    %v1666 = vsel %vm57, %v1640, 0.0
    %v1667 = vrot.slane %v1666, 4
    %v1668 = vadd.f32 %v1666, %v1667
    %v1669 = vrot.slane %v1668, 2
    %v1670 = vadd.f32 %v1668, %v1669
    %v1671 = vrot.slane %v1670, 1
    %v1672 = vadd.f32 %v1670, %v1671
    %v1673 = vsel %vm57, %v1641, 0.0
    %v1674 = vrot.slane %v1673, 4
    %v1675 = vadd.f32 %v1673, %v1674
    %v1676 = vrot.slane %v1675, 2
    %v1677 = vadd.f32 %v1675, %v1676
    %v1678 = vrot.slane %v1677, 1
    %v1679 = vadd.f32 %v1677, %v1678
    %v1680 = vsel %vm57, %v1642, 0.0
    %v1681 = vrot.slane %v1680, 4
    %v1682 = vadd.f32 %v1680, %v1681
    %v1683 = vrot.slane %v1682, 2
    %v1684 = vadd.f32 %v1682, %v1683
    %v1685 = vrot.slane %v1684, 1
    %v1686 = vadd.f32 %v1684, %v1685
    %v1687 = vsel %vm57, %v1643, 0.0
    %v1688 = vrot.slane %v1687, 4
    %v1689 = vadd.f32 %v1687, %v1688
    %v1690 = vrot.slane %v1689, 2
    %v1691 = vadd.f32 %v1689, %v1690
    %v1692 = vrot.slane %v1691, 1
    %v1693 = vadd.f32 %v1691, %v1692
    %v1694 = vsel %vm57, %v1644, 0.0
    %v1695 = vrot.slane %v1694, 4
    %v1696 = vadd.f32 %v1694, %v1695
    %v1697 = vrot.slane %v1696, 2
    %v1698 = vadd.f32 %v1696, %v1697
    %v1699 = vrot.slane %v1698, 1
    %v1700 = vadd.f32 %v1698, %v1699
    %v1709 = vsel %vm1092, %v1658, %v1651
    %v1710 = vsel %vm1094, %v1665, %v1709
    %v1711 = vsel %vm1096, %v1672, %v1710
    %v1712 = vsel %vm1098, %v1679, %v1711
    %v1713 = vsel %vm1100, %v1686, %v1712
    %v1714 = vsel %vm1102, %v1693, %v1713
    %v1715 = vsel %vm1104, %v1700, %v1714
    %1716 = vrot.lane.b32.xlu0 %v1715, 96
    %v1717 = vpop.permute.xlu0 %1716
    %vm1719 = vcmask 1048320
    %1720 = vst.msk [vmem:[#allocation2] sm:$0xff] %vm1719, %v1717
    // Predicated region
    $region22: #{tpu_custom_call.1} parent=1 // pred_check
      _
    $region23: #{tpu_custom_call.1} parent=1 // pred_check_branch
      %1722 = sbr.rel (0) target = $region25
    $region24: #{tpu_custom_call.1} parent=1 // pred_region
      %s1724 = ssub.s32 128, 128
      %1725 = vsyncadd [#allocation3], %s1724
      %s1727 = sshll.u32 [#allocation2], 4
      %s1728 = int_to_ptr.vmem [resolvable:$true] %s1727
      %1730 = dma.vmem_to_hbm [thread:$0]  %s1728, 128, %s5, [#allocation3]
    $region25: #{tpu_custom_call.1} parent=1 // pred_fallthru
      _
    // Predicated region
    $region26: #{tpu_custom_call.1} parent=1 // pred_check
      _
    $region27: #{tpu_custom_call.1} parent=1 // pred_check_branch
      %1732 = sbr.rel (0) target = $region29
    $region28: #{tpu_custom_call.1} parent=1 // pred_region
      %1733 = dma.done [#allocation3], 128
    $region29: #{tpu_custom_call.1} parent=1 // pred_fallthru
      _
    %1734 = vsyncpa [#allocation3], 1

</llo_original>
